<compile_context>
chip_gen: v5e
topology: v5e:2x2
jax: 0.10.0
libtpu: 0.0.40
codegen_flags: <defaults>
</compile_context>

<pallas_src>
import functools

import jax
import jax.numpy as jnp
from jax import lax
from jax.experimental import pallas as pl
from jax.experimental.pallas import tpu as pltpu

_EPS = 1e-5      # PyTorch default eps for both InstanceNorm2d and BatchNorm2d
_LANE = 128
_SUB = 8


def _round_up(x, m):
    return (x + m - 1) // m * m


def _vmem_limit_bytes():
    """Generation-aware scoped-VMEM limit: ~96 MiB on v5e/v6e (128 MiB VMEM),
    ~48 MiB on v7x (64 MiB physical)."""
    cap = 64 * 1024 * 1024
    try:
        cap = int(pltpu.get_tpu_info().vmem_capacity_bytes)
    except Exception:
        pass
    return int(min(cap * 3 // 4, 96 * 1024 * 1024))


def _pick_n_tile(n, kp, fp, vmem_limit):
    """Largest sublane-legal N tile whose double-buffered blocks fit the VMEM budget."""
    n8 = _round_up(n, _SUB)
    row_bytes = 4 * (kp + 2 * fp)                    # vec + feats + y per row (K3, heaviest)
    resident = 4 * (fp * fp + kp * fp + 8 * fp)      # weight + proj + scale/shift/bias blocks
    budget = max(vmem_limit // 2 - 2 * resident, 1 << 20)
    for t in (2048, 1024, 512, 256, 128):
        if t < n8 and 2 * t * row_bytes <= budget:
            return t
    return n8 if n8 <= 2048 else 128


# ----------------------------- kernels --------------------------------------


def _proj_stats_kernel(vec_ref, feats_ref, proj_ref, gram_ref, fsum_ref, usum_ref):
    """Per batch b, accumulated over N tiles:
         proj0 = U^T @ feats              (Kp, Fp)   (unscaled spectral projection)
         gram  = U^T @ U                  (Kp, Kp)
         fsum  = [sum feats; sum feats^2] (2,  Fp)
         usum  = column sums of U         (1,  Kp)
    All of the x = U@proj - feats statistics are then recovered analytically in the
    wrapper, which removes the former dedicated x-stats pass over vec/feats."""
    n = pl.program_id(1)

    @pl.when(n == 0)
    def _init():
        proj_ref[...] = jnp.zeros_like(proj_ref)
        gram_ref[...] = jnp.zeros_like(gram_ref)
        fsum_ref[...] = jnp.zeros_like(fsum_ref)
        usum_ref[...] = jnp.zeros_like(usum_ref)

    u = vec_ref[0]       # (TN, Kp)
    f = feats_ref[0]     # (TN, Fp)
    contract_n = (((0,), (0,)), ((), ()))   # transposed-LHS matmul; lowers to the MXU
    proj_ref[0] += lax.dot_general(u, f, contract_n, preferred_element_type=jnp.float32)
    gram_ref[0] += lax.dot_general(u, u, contract_n, preferred_element_type=jnp.float32)
    fsum_ref[0, 0:1, :] += jnp.sum(f, axis=0, keepdims=True)
    fsum_ref[0, 1:2, :] += jnp.sum(f * f, axis=0, keepdims=True)
    usum_ref[0] += jnp.sum(u, axis=0, keepdims=True)


def _stage1_kernel(vec_ref, proj_ref, feats_ref, scale_ref, shift_ref,
                   w_ref, bias_ref, y_ref, stats_ref, *, n_valid, tn, masked):
    """y = ReLU((U@proj - feats) * scale1 + shift1) @ W1 + b1; also per-(b,c) y stats."""
    n = pl.program_id(1)

    @pl.when(n == 0)
    def _init():
        stats_ref[...] = jnp.zeros_like(stats_ref)

    x = jnp.dot(vec_ref[0], proj_ref[0],
                preferred_element_type=jnp.float32) - feats_ref[0]
    h = jnp.maximum(x * scale_ref[0] + shift_ref[0], 0.0)
    y = jnp.dot(h, w_ref[...], preferred_element_type=jnp.float32) + bias_ref[...]
    y_ref[0] = y

    ys = y
    if masked:
        # Padded rows have y = ReLU(shift1) @ W1 + b1 != 0 -> keep them out of the stats.
        row = n * tn + lax.broadcasted_iota(jnp.int32, (tn, 1), 0)
        ys = jnp.where(row < n_valid, y, 0.0)
    stats_ref[0, 0:1, :] += jnp.sum(ys, axis=0, keepdims=True)
    stats_ref[0, 1:2, :] += jnp.sum(ys * ys, axis=0, keepdims=True)


def _stage2_kernel(y_ref, scale_ref, shift_ref, w_ref, bias_ref, out_ref):
    """out = ReLU(y * scale2 + shift2) @ W2 + b2."""
    h = jnp.maximum(y_ref[0] * scale_ref[0] + shift_ref[0], 0.0)
    out_ref[0] = jnp.dot(h, w_ref[...], preferred_element_type=jnp.float32) + bias_ref[...]


# ----------------------------- wrapper ---------------------------------------


def _fold_inst_batch_norm(sum_x, sum_x2, n_spatial, gamma, beta):
    """Fold InstanceNorm + training-mode BatchNorm + affine into per-(b,c) scale/shift.

    sum_x, sum_x2: (B, F) sums over the N valid spatial positions (tiny arrays).
    Returns (scale, shift), each (B, 1, F).
    """
    m = sum_x / n_spatial
    v = jnp.maximum(sum_x2 / n_spatial - m * m, 0.0)   # biased variance per (b, c)
    r = lax.rsqrt(v + _EPS)                            # InstanceNorm scale
    # IN output has exactly zero mean per (b, c); its (B, N) variance is mean_b v/(v+eps),
    # so training-mode BatchNorm collapses to one more per-channel scale.
    bn_var = jnp.mean(v / (v + _EPS), axis=0)
    q = lax.rsqrt(bn_var + _EPS) * gamma
    scale = r * q[None, :]
    shift = beta[None, :] - m * scale
    return scale[:, None, :], shift[:, None, :]


def cr_layer(feats, eig_vec, eig_val, params, *, eta):
    """feats: (B, N, F); eig_vec: (B, N, K); eig_val: (B, K)."""
    B, N, F = feats.shape
    K = eig_vec.shape[-1]
    f32 = jnp.float32

    Fp = _round_up(F, _LANE)
    Kp = _round_up(K, _SUB)        # K stays small; it is the full-extent lane dim of eig_vec blocks
    vmem_limit = _vmem_limit_bytes()
    TN = _pick_n_tile(N, Kp, Fp, vmem_limit)
    Np = _round_up(N, TN)
    NT = Np // TN

    # Lane-dense, MXU-friendly zero padding (zeros stay zero through the whole filter;
    # padded rows are zero through K1 and masked out of the stage-1 statistics).
    feats_p = jnp.zeros((B, Np, Fp), f32).at[:, :N, :F].set(feats.astype(f32))
    vec_p = jnp.zeros((B, Np, Kp), f32).at[:, :N, :K].set(eig_vec.astype(f32))
    val_p = jnp.zeros((B, Kp), f32).at[:, :K].set(eig_val.astype(f32))

    def pad_mat(w):
        return jnp.zeros((Fp, Fp), f32).at[:F, :F].set(w.astype(f32))

    def pad_row(v, fill=0.0):
        return jnp.full((Fp,), fill, f32).at[:F].set(v.astype(f32))

    w1 = pad_mat(params["w1"]); w2 = pad_mat(params["w2"])
    c1 = pad_row(params["c1"])[None, :]; c2 = pad_row(params["c2"])[None, :]
    g1 = pad_row(params["g1"], 1.0); b1 = pad_row(params["b1"])
    g2 = pad_row(params["g2"], 1.0); b2 = pad_row(params["b2"])

    # TODO(synk): v7x megacore — only B is a 'parallel' grid axis here; odd B leaves one
    # TensorCore idle (would need a parallel N super-axis producing partial accumulators).
    cp_red = pltpu.CompilerParams(
        dimension_semantics=("parallel", "arbitrary"), vmem_limit_bytes=vmem_limit)
    cp_par = pltpu.CompilerParams(
        dimension_semantics=("parallel", "parallel"), vmem_limit_bytes=vmem_limit)

    spec_feats = pl.BlockSpec((1, TN, Fp), lambda b, n: (b, n, 0))
    spec_vec   = pl.BlockSpec((1, TN, Kp), lambda b, n: (b, n, 0))
    spec_proj  = pl.BlockSpec((1, Kp, Fp), lambda b, n: (b, 0, 0))
    spec_gram  = pl.BlockSpec((1, Kp, Kp), lambda b, n: (b, 0, 0))
    spec_fsum  = pl.BlockSpec((1, 2, Fp),  lambda b, n: (b, 0, 0))
    spec_usum  = pl.BlockSpec((1, 1, Kp),  lambda b, n: (b, 0, 0))
    spec_bf    = pl.BlockSpec((1, 1, Fp),  lambda b, n: (b, 0, 0))
    spec_w     = pl.BlockSpec((Fp, Fp),    lambda b, n: (0, 0))
    spec_row   = pl.BlockSpec((1, Fp),     lambda b, n: (0, 0))

    grid = (B, NT)

    # K1: spectral projection + every ingredient of the x statistics, one pass over HBM.
    proj0, gram, fsum, usum = pl.pallas_call(
        _proj_stats_kernel,
        grid=grid,
        in_specs=[spec_vec, spec_feats],
        out_specs=(spec_proj, spec_gram, spec_fsum, spec_usum),
        out_shape=(jax.ShapeDtypeStruct((B, Kp, Fp), f32),
                   jax.ShapeDtypeStruct((B, Kp, Kp), f32),
                   jax.ShapeDtypeStruct((B, 2, Fp), f32),
                   jax.ShapeDtypeStruct((B, 1, Kp), f32)),
        compiler_params=cp_red,
    )(vec_p, feats_p)

    # Tiny wrapper glue: spectral scaling + analytic statistics of x = U@proj - feats.
    inv = 1.0 / (1.0 + eta * val_p)                       # (B, Kp)
    proj = proj0 * inv[:, :, None]                        # scaled projection, (B, Kp, Fp)
    sum_f = fsum[:, 0, :]
    sum_f2 = fsum[:, 1, :]
    sum_x = jnp.einsum("bik,bkf->bif", usum, proj)[:, 0, :] - sum_f
    gp = jnp.einsum("bkl,blf->bkf", gram, proj)
    sum_x2 = (jnp.sum(proj * gp, axis=1)                  # diag(P^T (U^T U) P)
              - 2.0 * jnp.sum(proj * proj0, axis=1)       # -2 diag(P^T U^T feats)
              + sum_f2)
    scale1, shift1 = _fold_inst_batch_norm(sum_x, sum_x2, N, g1, b1)

    # K3: stage-1 norm + ReLU + 1x1 conv (x recomputed from proj -> no HBM intermediate),
    # plus global per-(b, channel) statistics of y.
    y, stats_y = pl.pallas_call(
        functools.partial(_stage1_kernel, n_valid=N, tn=TN, masked=(Np != N)),
        grid=grid,
        in_specs=[spec_vec, spec_proj, spec_feats, spec_bf, spec_bf, spec_w, spec_row],
        out_specs=(spec_feats, spec_fsum),
        out_shape=(jax.ShapeDtypeStruct((B, Np, Fp), f32),
                   jax.ShapeDtypeStruct((B, 2, Fp), f32)),
        compiler_params=cp_red,
    )(vec_p, proj, feats_p, scale1, shift1, w1, c1)

    scale2, shift2 = _fold_inst_batch_norm(stats_y[:, 0, :], stats_y[:, 1, :], N, g2, b2)

    # K4: stage-2 norm + ReLU + 1x1 conv.
    out = pl.pallas_call(
        _stage2_kernel,
        grid=grid,
        in_specs=[spec_feats, spec_bf, spec_bf, spec_w, spec_row],
        out_specs=spec_feats,
        out_shape=jax.ShapeDtypeStruct((B, Np, Fp), f32),
        compiler_params=cp_par,
    )(y, scale2, shift2, w2, c2)

    # TODO(synk): optionally store big streams (feats/vec/y) in bf16 with f32 MXU
    # accumulation on v6e/v7x if the accuracy contract is relaxed below 1e-4.
    return out[:, :N, :F]


# --------------------------- pure-JAX reference -------------------------------


def _norm_relu_conv(x, gamma, beta, w, bias, eps=_EPS):
    """InstanceNorm2d -> BatchNorm2d (train stats) -> ReLU -> Conv2d(1x1), sequentially."""
    m = jnp.mean(x, axis=1, keepdims=True)
    v = jnp.mean((x - m) ** 2, axis=1, keepdims=True)
    x = (x - m) * lax.rsqrt(v + eps)
    bm = jnp.mean(x, axis=(0, 1), keepdims=True)
    bv = jnp.mean((x - bm) ** 2, axis=(0, 1), keepdims=True)
    x = (x - bm) * lax.rsqrt(bv + eps)
    x = x * gamma[None, None, :] + beta[None, None, :]
    x = jnp.maximum(x, 0.0)
    x = jnp.einsum("bnf,fg->bng", x, w, preferred_element_type=jnp.float32)
    return x + bias[None, None, :]


def cr_layer_ref(feats, eig_vec, eig_val, params, eta):
    proj = jnp.einsum("bnk,bnf->bkf", eig_vec, feats)
    proj = proj / (1.0 + eta * eig_val)[:, :, None]
    x = jnp.einsum("bnk,bkf->bnf", eig_vec, proj) - feats
    x = _norm_relu_conv(x, params["g1"], params["b1"], params["w1"], params["c1"])
    x = _norm_relu_conv(x, params["g2"], params["b2"], params["w2"], params["c2"])
    return x


# ------------------------------------ main ------------------------------------


if __name__ == "__main__":
    B, N, F, K = 2, 16, 32, 8     # batch, num points (H; W=1), feats_dim, num eigenvectors
    eta = 0.9

    key = jax.random.PRNGKey(0)
    k_feats, k_vec, k_val, k_w1, k_c1, k_w2, k_c2 = jax.random.split(key, 7)

    feats = jax.random.normal(k_feats, (B, N, F), dtype=jnp.float32)
    eig_vec = jax.random.normal(k_vec, (B, N, K), dtype=jnp.float32)
    eig_val = jax.random.uniform(k_val, (B, K), dtype=jnp.float32)

    params = {
        # BatchNorm2d #1 (PyTorch default affine init: gamma=1, beta=0)
        "g1": jnp.ones((F,), jnp.float32),
        "b1": jnp.zeros((F,), jnp.float32),
        # Conv2d #1 (weight stored as (F_in, F_out) = torch weight[:, :, 0, 0].T)
        "w1": 0.1 * jax.random.normal(k_w1, (F, F), dtype=jnp.float32),
        "c1": 0.05 * jax.random.normal(k_c1, (F,), dtype=jnp.float32),
        # BatchNorm2d #2
        "g2": jnp.ones((F,), jnp.float32),
        "b2": jnp.zeros((F,), jnp.float32),
        # Conv2d #2
        "w2": 0.1 * jax.random.normal(k_w2, (F, F), dtype=jnp.float32),
        "c2": 0.05 * jax.random.normal(k_c2, (F,), dtype=jnp.float32),
    }

    # TODO(synk): running BatchNorm mean/var buffers are not updated (forward-only kernel).
    fwd = jax.jit(functools.partial(cr_layer, eta=eta))
    out = jax.block_until_ready(fwd(feats, eig_vec, eig_val, params))

    ref = cr_layer_ref(feats, eig_vec, eig_val, params, eta)
    assert out.shape == (B, N, F)
    assert jnp.allclose(out, ref, atol=1e-4, rtol=1e-4), "mismatch vs JAX reference"

    print("KERNEL_OK")
</pallas_src>

<mosaic_0001>
module attributes {stable_mosaic.version = 11 : i64} {
  func.func @_proj_stats_kernel(%arg0: i32, %arg1: i32, %arg2: memref<1x16x8xf32, #tpu.memory_space<vmem>>, %arg3: memref<1x16x128xf32, #tpu.memory_space<vmem>>, %arg4: memref<1x8x128xf32, #tpu.memory_space<vmem>>, %arg5: memref<1x8x8xf32, #tpu.memory_space<vmem>>, %arg6: memref<1x2x128xf32, #tpu.memory_space<vmem>>, %arg7: memref<1x1x8xf32, #tpu.memory_space<vmem>>) attributes {dimension_semantics = [#tpu.dimension_semantics<parallel>, #tpu.dimension_semantics<arbitrary>], iteration_bounds = array<i64: 2, 1>, scalar_prefetch = 0 : i64, scratch_operands = 0 : i64, tpu.core_type = #tpu.core_type<tc>, window_params = [{transform_indices = @transform_0, window_bounds = array<i64: 1, 16, 8>}, {transform_indices = @transform_1, window_bounds = array<i64: 1, 16, 128>}, {transform_indices = @transform_2, window_bounds = array<i64: 1, 8, 128>}, {transform_indices = @transform_3, window_bounds = array<i64: 1, 8, 8>}, {transform_indices = @transform_4, window_bounds = array<i64: 1, 2, 128>}, {transform_indices = @transform_5, window_bounds = array<i64: 1, 1, 8>}]} {
    %c0_i32 = arith.constant 0 : i32
    %0 = arith.cmpi eq, %arg1, %c0_i32 : i32
    %1 = arith.extui %0 : i1 to i32
    %c0_i32_0 = arith.constant 0 : i32
    %2 = arith.cmpi ne, %1, %c0_i32_0 : i32
    scf.if %2 {
      %cst_39 = arith.constant 0.000000e+00 : f32
      %46 = vector.broadcast %cst_39 : f32 to vector<1x8x128xf32>
      %c0_40 = arith.constant 0 : index
      %c0_41 = arith.constant 0 : index
      %c0_42 = arith.constant 0 : index
      %47 = vector.load %arg4[%c0_40, %c0_41, %c0_42] : memref<1x8x128xf32, #tpu.memory_space<vmem>>, vector<1x8x128xf32>
      tpu.vector_store %arg4[%c0_40, %c0_41, %c0_42], %46 {strides = array<i32>} : memref<1x8x128xf32, #tpu.memory_space<vmem>>, vector<1x8x128xf32>,
      %cst_43 = arith.constant 0.000000e+00 : f32
      %48 = vector.broadcast %cst_43 : f32 to vector<1x8x8xf32>
      %c0_44 = arith.constant 0 : index
      %c0_45 = arith.constant 0 : index
      %c0_46 = arith.constant 0 : index
      %49 = vector.load %arg5[%c0_44, %c0_45, %c0_46] : memref<1x8x8xf32, #tpu.memory_space<vmem>>, vector<1x8x8xf32>
      tpu.vector_store %arg5[%c0_44, %c0_45, %c0_46], %48 {strides = array<i32>} : memref<1x8x8xf32, #tpu.memory_space<vmem>>, vector<1x8x8xf32>,
      %cst_47 = arith.constant 0.000000e+00 : f32
      %50 = vector.broadcast %cst_47 : f32 to vector<1x2x128xf32>
      %c0_48 = arith.constant 0 : index
      %c0_49 = arith.constant 0 : index
      %c0_50 = arith.constant 0 : index
      %51 = vector.load %arg6[%c0_48, %c0_49, %c0_50] : memref<1x2x128xf32, #tpu.memory_space<vmem>>, vector<1x2x128xf32>
      tpu.vector_store %arg6[%c0_48, %c0_49, %c0_50], %50 {strides = array<i32>} : memref<1x2x128xf32, #tpu.memory_space<vmem>>, vector<1x2x128xf32>,
      %cst_51 = arith.constant 0.000000e+00 : f32
      %52 = vector.broadcast %cst_51 : f32 to vector<1x1x8xf32>
      %c0_52 = arith.constant 0 : index
      %c0_53 = arith.constant 0 : index
      %c0_54 = arith.constant 0 : index
      %53 = vector.load %arg7[%c0_52, %c0_53, %c0_54] : memref<1x1x8xf32, #tpu.memory_space<vmem>>, vector<1x1x8xf32>
      tpu.vector_store %arg7[%c0_52, %c0_53, %c0_54], %52 {strides = array<i32>} : memref<1x1x8xf32, #tpu.memory_space<vmem>>, vector<1x1x8xf32>,
    } else {
    }
    %c0 = arith.constant 0 : index
    %c0_1 = arith.constant 0 : index
    %c0_2 = arith.constant 0 : index
    %3 = vector.load %arg2[%c0, %c0_1, %c0_2] : memref<1x16x8xf32, #tpu.memory_space<vmem>>, vector<1x16x8xf32>
    %4 = vector.shape_cast %3 : vector<1x16x8xf32> to vector<16x8xf32>
    %c0_3 = arith.constant 0 : index
    %c0_4 = arith.constant 0 : index
    %c0_5 = arith.constant 0 : index
    %5 = vector.load %arg3[%c0_3, %c0_4, %c0_5] : memref<1x16x128xf32, #tpu.memory_space<vmem>>, vector<1x16x128xf32>
    %6 = vector.shape_cast %5 : vector<1x16x128xf32> to vector<16x128xf32>
    %c0_6 = arith.constant 0 : index
    %c0_7 = arith.constant 0 : index
    %c0_8 = arith.constant 0 : index
    %7 = vector.load %arg4[%c0_6, %c0_7, %c0_8] : memref<1x8x128xf32, #tpu.memory_space<vmem>>, vector<1x8x128xf32>
    %8 = vector.shape_cast %7 : vector<1x8x128xf32> to vector<8x128xf32>
    %cst = arith.constant dense<0.000000e+00> : vector<8x128xf32>
    %9 = tpu.matmul %4, %6, %cst {dimension_numbers = #tpu.dot_dimension_numbers<[0], [0], [1], [1], [0, 1, 1, 1], [], []>} : vector<16x8xf32>, vector<16x128xf32>, vector<8x128xf32> -> vector<8x128xf32>
    %10 = arith.addf %8, %9 : vector<8x128xf32>
    %c0_9 = arith.constant 0 : index
    %c0_10 = arith.constant 0 : index
    %c0_11 = arith.constant 0 : index
    %11 = vector.load %arg4[%c0_9, %c0_10, %c0_11] : memref<1x8x128xf32, #tpu.memory_space<vmem>>, vector<1x8x128xf32>
    %12 = vector.shape_cast %11 : vector<1x8x128xf32> to vector<8x128xf32>
    %13 = vector.shape_cast %10 : vector<8x128xf32> to vector<1x8x128xf32>
    tpu.vector_store %arg4[%c0_9, %c0_10, %c0_11], %13 {strides = array<i32>} : memref<1x8x128xf32, #tpu.memory_space<vmem>>, vector<1x8x128xf32>,
    %c0_12 = arith.constant 0 : index
    %c0_13 = arith.constant 0 : index
    %c0_14 = arith.constant 0 : index
    %14 = vector.load %arg5[%c0_12, %c0_13, %c0_14] : memref<1x8x8xf32, #tpu.memory_space<vmem>>, vector<1x8x8xf32>
    %15 = vector.shape_cast %14 : vector<1x8x8xf32> to vector<8x8xf32>
    %cst_15 = arith.constant dense<0.000000e+00> : vector<8x8xf32>
    %16 = tpu.matmul %4, %4, %cst_15 {dimension_numbers = #tpu.dot_dimension_numbers<[0], [0], [1], [1], [0, 1, 1, 1], [], []>} : vector<16x8xf32>, vector<16x8xf32>, vector<8x8xf32> -> vector<8x8xf32>
    %17 = arith.addf %15, %16 : vector<8x8xf32>
    %c0_16 = arith.constant 0 : index
    %c0_17 = arith.constant 0 : index
    %c0_18 = arith.constant 0 : index
    %18 = vector.load %arg5[%c0_16, %c0_17, %c0_18] : memref<1x8x8xf32, #tpu.memory_space<vmem>>, vector<1x8x8xf32>
    %19 = vector.shape_cast %18 : vector<1x8x8xf32> to vector<8x8xf32>
    %20 = vector.shape_cast %17 : vector<8x8xf32> to vector<1x8x8xf32>
    tpu.vector_store %arg5[%c0_16, %c0_17, %c0_18], %20 {strides = array<i32>} : memref<1x8x8xf32, #tpu.memory_space<vmem>>, vector<1x8x8xf32>,
    %c0_19 = arith.constant 0 : index
    %c0_20 = arith.constant 0 : index
    %c0_21 = arith.constant 0 : index
    %21 = vector.load %arg6[%c0_19, %c0_20, %c0_21] : memref<1x2x128xf32, #tpu.memory_space<vmem>>, vector<1x1x128xf32>
    %22 = vector.shape_cast %21 : vector<1x1x128xf32> to vector<1x128xf32>
    %cst_22 = arith.constant dense<0.000000e+00> : vector<128xf32>
    %23 = vector.multi_reduction <add>, %6, %cst_22 [0] : vector<16x128xf32> to vector<128xf32>
    %24 = vector.shape_cast %23 : vector<128xf32> to vector<1x128xf32>
    %25 = arith.addf %22, %24 : vector<1x128xf32>
    %c0_23 = arith.constant 0 : index
    %c0_24 = arith.constant 0 : index
    %c0_25 = arith.constant 0 : index
    %26 = vector.load %arg6[%c0_23, %c0_24, %c0_25] : memref<1x2x128xf32, #tpu.memory_space<vmem>>, vector<1x1x128xf32>
    %27 = vector.shape_cast %26 : vector<1x1x128xf32> to vector<1x128xf32>
    %28 = vector.shape_cast %25 : vector<1x128xf32> to vector<1x1x128xf32>
    tpu.vector_store %arg6[%c0_23, %c0_24, %c0_25], %28 {strides = array<i32>} : memref<1x2x128xf32, #tpu.memory_space<vmem>>, vector<1x1x128xf32>,
    %c0_26 = arith.constant 0 : index
    %c1 = arith.constant 1 : index
    %c0_27 = arith.constant 0 : index
    %29 = vector.load %arg6[%c0_26, %c1, %c0_27] : memref<1x2x128xf32, #tpu.memory_space<vmem>>, vector<1x1x128xf32>
    %30 = vector.shape_cast %29 : vector<1x1x128xf32> to vector<1x128xf32>
    %31 = arith.mulf %6, %6 : vector<16x128xf32>
    %cst_28 = arith.constant dense<0.000000e+00> : vector<128xf32>
    %32 = vector.multi_reduction <add>, %31, %cst_28 [0] : vector<16x128xf32> to vector<128xf32>
    %33 = vector.shape_cast %32 : vector<128xf32> to vector<1x128xf32>
    %34 = arith.addf %30, %33 : vector<1x128xf32>
    %c0_29 = arith.constant 0 : index
    %c1_30 = arith.constant 1 : index
    %c0_31 = arith.constant 0 : index
    %35 = vector.load %arg6[%c0_29, %c1_30, %c0_31] : memref<1x2x128xf32, #tpu.memory_space<vmem>>, vector<1x1x128xf32>
    %36 = vector.shape_cast %35 : vector<1x1x128xf32> to vector<1x128xf32>
    %37 = vector.shape_cast %34 : vector<1x128xf32> to vector<1x1x128xf32>
    tpu.vector_store %arg6[%c0_29, %c1_30, %c0_31], %37 {strides = array<i32>} : memref<1x2x128xf32, #tpu.memory_space<vmem>>, vector<1x1x128xf32>,
    %c0_32 = arith.constant 0 : index
    %c0_33 = arith.constant 0 : index
    %c0_34 = arith.constant 0 : index
    %38 = vector.load %arg7[%c0_32, %c0_33, %c0_34] : memref<1x1x8xf32, #tpu.memory_space<vmem>>, vector<1x1x8xf32>
    %39 = vector.shape_cast %38 : vector<1x1x8xf32> to vector<1x8xf32>
    %cst_35 = arith.constant dense<0.000000e+00> : vector<8xf32>
    %40 = vector.multi_reduction <add>, %4, %cst_35 [0] : vector<16x8xf32> to vector<8xf32>
    %41 = vector.shape_cast %40 : vector<8xf32> to vector<1x8xf32>
    %42 = arith.addf %39, %41 : vector<1x8xf32>
    %c0_36 = arith.constant 0 : index
    %c0_37 = arith.constant 0 : index
    %c0_38 = arith.constant 0 : index
    %43 = vector.load %arg7[%c0_36, %c0_37, %c0_38] : memref<1x1x8xf32, #tpu.memory_space<vmem>>, vector<1x1x8xf32>
    %44 = vector.shape_cast %43 : vector<1x1x8xf32> to vector<1x8xf32>
    %45 = vector.shape_cast %42 : vector<1x8xf32> to vector<1x1x8xf32>
    tpu.vector_store %arg7[%c0_36, %c0_37, %c0_38], %45 {strides = array<i32>} : memref<1x1x8xf32, #tpu.memory_space<vmem>>, vector<1x1x8xf32>,
    return
  }
  func.func @transform_0(%arg0: i32, %arg1: i32) -> (i32, i32, i32) {
    %c0_i32 = arith.constant 0 : i32
    %c0_i32_0 = arith.constant 0 : i32
    return %arg0, %arg1, %c0_i32 : i32, i32, i32
  }
  func.func @transform_1(%arg0: i32, %arg1: i32) -> (i32, i32, i32) {
    %c0_i32 = arith.constant 0 : i32
    %c0_i32_0 = arith.constant 0 : i32
    return %arg0, %arg1, %c0_i32 : i32, i32, i32
  }
  func.func @transform_2(%arg0: i32, %arg1: i32) -> (i32, i32, i32) {
    %c0_i32 = arith.constant 0 : i32
    %c0_i32_0 = arith.constant 0 : i32
    %c0_i32_1 = arith.constant 0 : i32
    return %arg0, %c0_i32, %c0_i32_0 : i32, i32, i32
  }
  func.func @transform_3(%arg0: i32, %arg1: i32) -> (i32, i32, i32) {
    %c0_i32 = arith.constant 0 : i32
    %c0_i32_0 = arith.constant 0 : i32
    %c0_i32_1 = arith.constant 0 : i32
    return %arg0, %c0_i32, %c0_i32_0 : i32, i32, i32
  }
  func.func @transform_4(%arg0: i32, %arg1: i32) -> (i32, i32, i32) {
    %c0_i32 = arith.constant 0 : i32
    %c0_i32_0 = arith.constant 0 : i32
    %c0_i32_1 = arith.constant 0 : i32
    return %arg0, %c0_i32, %c0_i32_0 : i32, i32, i32
  }
  func.func @transform_5(%arg0: i32, %arg1: i32) -> (i32, i32, i32) {
    %c0_i32 = arith.constant 0 : i32
    %c0_i32_0 = arith.constant 0 : i32
    %c0_i32_1 = arith.constant 0 : i32
    return %arg0, %c0_i32, %c0_i32_0 : i32, i32, i32
  }
}

module attributes {stable_mosaic.version = 11 : i64} {
  func.func @_stage2_kernel(%arg0: i32, %arg1: i32, %arg2: memref<1x16x128xf32, #tpu.memory_space<vmem>>, %arg3: memref<1x1x128xf32, #tpu.memory_space<vmem>>, %arg4: memref<1x1x128xf32, #tpu.memory_space<vmem>>, %arg5: memref<128x128xf32, #tpu.memory_space<vmem>>, %arg6: memref<1x128xf32, #tpu.memory_space<vmem>>, %arg7: memref<1x16x128xf32, #tpu.memory_space<vmem>>) attributes {dimension_semantics = [#tpu.dimension_semantics<parallel>, #tpu.dimension_semantics<parallel>], iteration_bounds = array<i64: 2, 1>, scalar_prefetch = 0 : i64, scratch_operands = 0 : i64, tpu.core_type = #tpu.core_type<tc>, window_params = [{transform_indices = @transform_0, window_bounds = array<i64: 1, 16, 128>}, {transform_indices = @transform_1, window_bounds = array<i64: 1, 1, 128>}, {transform_indices = @transform_2, window_bounds = array<i64: 1, 1, 128>}, {pipeline_mode = #tpu.pipeline_mode<synchronous>, transform_indices = @transform_3, window_bounds = array<i64: 128, 128>}, {pipeline_mode = #tpu.pipeline_mode<synchronous>, transform_indices = @transform_4, window_bounds = array<i64: 1, 128>}, {transform_indices = @transform_5, window_bounds = array<i64: 1, 16, 128>}]} {
    %c0 = arith.constant 0 : index
    %c0_0 = arith.constant 0 : index
    %c0_1 = arith.constant 0 : index
    %0 = vector.load %arg2[%c0, %c0_0, %c0_1] : memref<1x16x128xf32, #tpu.memory_space<vmem>>, vector<1x16x128xf32>
    %1 = vector.shape_cast %0 : vector<1x16x128xf32> to vector<16x128xf32>
    %c0_2 = arith.constant 0 : index
    %c0_3 = arith.constant 0 : index
    %c0_4 = arith.constant 0 : index
    %2 = vector.load %arg3[%c0_2, %c0_3, %c0_4] : memref<1x1x128xf32, #tpu.memory_space<vmem>>, vector<1x1x128xf32>
    %3 = vector.shape_cast %2 : vector<1x1x128xf32> to vector<1x128xf32>
    %4 = vector.broadcast %3 : vector<1x128xf32> to vector<16x128xf32>
    %5 = arith.mulf %1, %4 : vector<16x128xf32>
    %c0_5 = arith.constant 0 : index
    %c0_6 = arith.constant 0 : index
    %c0_7 = arith.constant 0 : index
    %6 = vector.load %arg4[%c0_5, %c0_6, %c0_7] : memref<1x1x128xf32, #tpu.memory_space<vmem>>, vector<1x1x128xf32>
    %7 = vector.shape_cast %6 : vector<1x1x128xf32> to vector<1x128xf32>
    %8 = vector.broadcast %7 : vector<1x128xf32> to vector<16x128xf32>
    %9 = arith.addf %5, %8 : vector<16x128xf32>
    %cst = arith.constant 0.000000e+00 : f32
    %10 = vector.broadcast %cst : f32 to vector<16x128xf32>
    %11 = arith.maximumf %9, %10 : vector<16x128xf32>
    %c0_8 = arith.constant 0 : index
    %c0_9 = arith.constant 0 : index
    %12 = vector.load %arg5[%c0_8, %c0_9] : memref<128x128xf32, #tpu.memory_space<vmem>>, vector<128x128xf32>
    %cst_10 = arith.constant dense<0.000000e+00> : vector<16x128xf32>
    %13 = tpu.matmul %11, %12, %cst_10 {dimension_numbers = #tpu.dot_dimension_numbers<[1], [0], [0], [1], [0, 0, 1, 1], [], []>} : vector<16x128xf32>, vector<128x128xf32>, vector<16x128xf32> -> vector<16x128xf32>
    %c0_11 = arith.constant 0 : index
    %c0_12 = arith.constant 0 : index
    %14 = vector.load %arg6[%c0_11, %c0_12] : memref<1x128xf32, #tpu.memory_space<vmem>>, vector<1x128xf32>
    %15 = vector.broadcast %14 : vector<1x128xf32> to vector<16x128xf32>
    %16 = arith.addf %13, %15 : vector<16x128xf32>
    %c0_13 = arith.constant 0 : index
    %c0_14 = arith.constant 0 : index
    %c0_15 = arith.constant 0 : index
    %17 = vector.load %arg7[%c0_13, %c0_14, %c0_15] : memref<1x16x128xf32, #tpu.memory_space<vmem>>, vector<1x16x128xf32>
    %18 = vector.shape_cast %17 : vector<1x16x128xf32> to vector<16x128xf32>
    %19 = vector.shape_cast %16 : vector<16x128xf32> to vector<1x16x128xf32>
    tpu.vector_store %arg7[%c0_13, %c0_14, %c0_15], %19 {strides = array<i32>} : memref<1x16x128xf32, #tpu.memory_space<vmem>>, vector<1x16x128xf32>,
    return
  }
  func.func @transform_0(%arg0: i32, %arg1: i32) -> (i32, i32, i32) {
    %c0_i32 = arith.constant 0 : i32
    %c0_i32_0 = arith.constant 0 : i32
    return %arg0, %arg1, %c0_i32 : i32, i32, i32
  }
  func.func @transform_1(%arg0: i32, %arg1: i32) -> (i32, i32, i32) {
    %c0_i32 = arith.constant 0 : i32
    %c0_i32_0 = arith.constant 0 : i32
    %c0_i32_1 = arith.constant 0 : i32
    return %arg0, %c0_i32, %c0_i32_0 : i32, i32, i32
  }
  func.func @transform_2(%arg0: i32, %arg1: i32) -> (i32, i32, i32) {
    %c0_i32 = arith.constant 0 : i32
    %c0_i32_0 = arith.constant 0 : i32
    %c0_i32_1 = arith.constant 0 : i32
    return %arg0, %c0_i32, %c0_i32_0 : i32, i32, i32
  }
  func.func @transform_3(%arg0: i32, %arg1: i32) -> (i32, i32) {
    %c0_i32 = arith.constant 0 : i32
    %c0_i32_0 = arith.constant 0 : i32
    %c0_i32_1 = arith.constant 0 : i32
    return %c0_i32, %c0_i32_0 : i32, i32
  }
  func.func @transform_4(%arg0: i32, %arg1: i32) -> (i32, i32) {
    %c0_i32 = arith.constant 0 : i32
    %c0_i32_0 = arith.constant 0 : i32
    %c0_i32_1 = arith.constant 0 : i32
    return %c0_i32, %c0_i32_0 : i32, i32
  }
  func.func @transform_5(%arg0: i32, %arg1: i32) -> (i32, i32, i32) {
    %c0_i32 = arith.constant 0 : i32
    %c0_i32_0 = arith.constant 0 : i32
    return %arg0, %arg1, %c0_i32 : i32, i32, i32
  }
}

module attributes {stable_mosaic.version = 11 : i64} {
  func.func @_stage1_kernel(%arg0: i32, %arg1: i32, %arg2: memref<1x16x8xf32, #tpu.memory_space<vmem>>, %arg3: memref<1x8x128xf32, #tpu.memory_space<vmem>>, %arg4: memref<1x16x128xf32, #tpu.memory_space<vmem>>, %arg5: memref<1x1x128xf32, #tpu.memory_space<vmem>>, %arg6: memref<1x1x128xf32, #tpu.memory_space<vmem>>, %arg7: memref<128x128xf32, #tpu.memory_space<vmem>>, %arg8: memref<1x128xf32, #tpu.memory_space<vmem>>, %arg9: memref<1x16x128xf32, #tpu.memory_space<vmem>>, %arg10: memref<1x2x128xf32, #tpu.memory_space<vmem>>) attributes {dimension_semantics = [#tpu.dimension_semantics<parallel>, #tpu.dimension_semantics<arbitrary>], iteration_bounds = array<i64: 2, 1>, scalar_prefetch = 0 : i64, scratch_operands = 0 : i64, tpu.core_type = #tpu.core_type<tc>, window_params = [{transform_indices = @transform_0, window_bounds = array<i64: 1, 16, 8>}, {transform_indices = @transform_1, window_bounds = array<i64: 1, 8, 128>}, {transform_indices = @transform_2, window_bounds = array<i64: 1, 16, 128>}, {transform_indices = @transform_3, window_bounds = array<i64: 1, 1, 128>}, {transform_indices = @transform_4, window_bounds = array<i64: 1, 1, 128>}, {pipeline_mode = #tpu.pipeline_mode<synchronous>, transform_indices = @transform_5, window_bounds = array<i64: 128, 128>}, {pipeline_mode = #tpu.pipeline_mode<synchronous>, transform_indices = @transform_6, window_bounds = array<i64: 1, 128>}, {transform_indices = @transform_7, window_bounds = array<i64: 1, 16, 128>}, {transform_indices = @transform_8, window_bounds = array<i64: 1, 2, 128>}]} {
    %c0_i32 = arith.constant 0 : i32
    %0 = arith.cmpi eq, %arg1, %c0_i32 : i32
    %1 = arith.extui %0 : i1 to i32
    %c0_i32_0 = arith.constant 0 : i32
    %2 = arith.cmpi ne, %1, %c0_i32_0 : i32
    scf.if %2 {
      %cst_37 = arith.constant 0.000000e+00 : f32
      %46 = vector.broadcast %cst_37 : f32 to vector<1x2x128xf32>
      %c0_38 = arith.constant 0 : index
      %c0_39 = arith.constant 0 : index
      %c0_40 = arith.constant 0 : index
      %47 = vector.load %arg10[%c0_38, %c0_39, %c0_40] : memref<1x2x128xf32, #tpu.memory_space<vmem>>, vector<1x2x128xf32>
      tpu.vector_store %arg10[%c0_38, %c0_39, %c0_40], %46 {strides = array<i32>} : memref<1x2x128xf32, #tpu.memory_space<vmem>>, vector<1x2x128xf32>,
    } else {
    }
    %c0 = arith.constant 0 : index
    %c0_1 = arith.constant 0 : index
    %c0_2 = arith.constant 0 : index
    %3 = vector.load %arg2[%c0, %c0_1, %c0_2] : memref<1x16x8xf32, #tpu.memory_space<vmem>>, vector<1x16x8xf32>
    %4 = vector.shape_cast %3 : vector<1x16x8xf32> to vector<16x8xf32>
    %c0_3 = arith.constant 0 : index
    %c0_4 = arith.constant 0 : index
    %c0_5 = arith.constant 0 : index
    %5 = vector.load %arg3[%c0_3, %c0_4, %c0_5] : memref<1x8x128xf32, #tpu.memory_space<vmem>>, vector<1x8x128xf32>
    %6 = vector.shape_cast %5 : vector<1x8x128xf32> to vector<8x128xf32>
    %cst = arith.constant dense<0.000000e+00> : vector<16x128xf32>
    %7 = tpu.matmul %4, %6, %cst {dimension_numbers = #tpu.dot_dimension_numbers<[1], [0], [0], [1], [0, 0, 1, 1], [], []>} : vector<16x8xf32>, vector<8x128xf32>, vector<16x128xf32> -> vector<16x128xf32>
    %c0_6 = arith.constant 0 : index
    %c0_7 = arith.constant 0 : index
    %c0_8 = arith.constant 0 : index
    %8 = vector.load %arg4[%c0_6, %c0_7, %c0_8] : memref<1x16x128xf32, #tpu.memory_space<vmem>>, vector<1x16x128xf32>
    %9 = vector.shape_cast %8 : vector<1x16x128xf32> to vector<16x128xf32>
    %10 = arith.subf %7, %9 : vector<16x128xf32>
    %c0_9 = arith.constant 0 : index
    %c0_10 = arith.constant 0 : index
    %c0_11 = arith.constant 0 : index
    %11 = vector.load %arg5[%c0_9, %c0_10, %c0_11] : memref<1x1x128xf32, #tpu.memory_space<vmem>>, vector<1x1x128xf32>
    %12 = vector.shape_cast %11 : vector<1x1x128xf32> to vector<1x128xf32>
    %13 = vector.broadcast %12 : vector<1x128xf32> to vector<16x128xf32>
    %14 = arith.mulf %10, %13 : vector<16x128xf32>
    %c0_12 = arith.constant 0 : index
    %c0_13 = arith.constant 0 : index
    %c0_14 = arith.constant 0 : index
    %15 = vector.load %arg6[%c0_12, %c0_13, %c0_14] : memref<1x1x128xf32, #tpu.memory_space<vmem>>, vector<1x1x128xf32>
    %16 = vector.shape_cast %15 : vector<1x1x128xf32> to vector<1x128xf32>
    %17 = vector.broadcast %16 : vector<1x128xf32> to vector<16x128xf32>
    %18 = arith.addf %14, %17 : vector<16x128xf32>
    %cst_15 = arith.constant 0.000000e+00 : f32
    %19 = vector.broadcast %cst_15 : f32 to vector<16x128xf32>
    %20 = arith.maximumf %18, %19 : vector<16x128xf32>
    %c0_16 = arith.constant 0 : index
    %c0_17 = arith.constant 0 : index
    %21 = vector.load %arg7[%c0_16, %c0_17] : memref<128x128xf32, #tpu.memory_space<vmem>>, vector<128x128xf32>
    %cst_18 = arith.constant dense<0.000000e+00> : vector<16x128xf32>
    %22 = tpu.matmul %20, %21, %cst_18 {dimension_numbers = #tpu.dot_dimension_numbers<[1], [0], [0], [1], [0, 0, 1, 1], [], []>} : vector<16x128xf32>, vector<128x128xf32>, vector<16x128xf32> -> vector<16x128xf32>
    %c0_19 = arith.constant 0 : index
    %c0_20 = arith.constant 0 : index
    %23 = vector.load %arg8[%c0_19, %c0_20] : memref<1x128xf32, #tpu.memory_space<vmem>>, vector<1x128xf32>
    %24 = vector.broadcast %23 : vector<1x128xf32> to vector<16x128xf32>
    %25 = arith.addf %22, %24 : vector<16x128xf32>
    %c0_21 = arith.constant 0 : index
    %c0_22 = arith.constant 0 : index
    %c0_23 = arith.constant 0 : index
    %26 = vector.load %arg9[%c0_21, %c0_22, %c0_23] : memref<1x16x128xf32, #tpu.memory_space<vmem>>, vector<1x16x128xf32>
    %27 = vector.shape_cast %26 : vector<1x16x128xf32> to vector<16x128xf32>
    %28 = vector.shape_cast %25 : vector<16x128xf32> to vector<1x16x128xf32>
    tpu.vector_store %arg9[%c0_21, %c0_22, %c0_23], %28 {strides = array<i32>} : memref<1x16x128xf32, #tpu.memory_space<vmem>>, vector<1x16x128xf32>,
    %c0_24 = arith.constant 0 : index
    %c0_25 = arith.constant 0 : index
    %c0_26 = arith.constant 0 : index
    %29 = vector.load %arg10[%c0_24, %c0_25, %c0_26] : memref<1x2x128xf32, #tpu.memory_space<vmem>>, vector<1x1x128xf32>
    %30 = vector.shape_cast %29 : vector<1x1x128xf32> to vector<1x128xf32>
    %cst_27 = arith.constant dense<0.000000e+00> : vector<128xf32>
    %31 = vector.multi_reduction <add>, %25, %cst_27 [0] : vector<16x128xf32> to vector<128xf32>
    %32 = vector.shape_cast %31 : vector<128xf32> to vector<1x128xf32>
    %33 = arith.addf %30, %32 : vector<1x128xf32>
    %c0_28 = arith.constant 0 : index
    %c0_29 = arith.constant 0 : index
    %c0_30 = arith.constant 0 : index
    %34 = vector.load %arg10[%c0_28, %c0_29, %c0_30] : memref<1x2x128xf32, #tpu.memory_space<vmem>>, vector<1x1x128xf32>
    %35 = vector.shape_cast %34 : vector<1x1x128xf32> to vector<1x128xf32>
    %36 = vector.shape_cast %33 : vector<1x128xf32> to vector<1x1x128xf32>
    tpu.vector_store %arg10[%c0_28, %c0_29, %c0_30], %36 {strides = array<i32>} : memref<1x2x128xf32, #tpu.memory_space<vmem>>, vector<1x1x128xf32>,
    %c0_31 = arith.constant 0 : index
    %c1 = arith.constant 1 : index
    %c0_32 = arith.constant 0 : index
    %37 = vector.load %arg10[%c0_31, %c1, %c0_32] : memref<1x2x128xf32, #tpu.memory_space<vmem>>, vector<1x1x128xf32>
    %38 = vector.shape_cast %37 : vector<1x1x128xf32> to vector<1x128xf32>
    %39 = arith.mulf %25, %25 : vector<16x128xf32>
    %cst_33 = arith.constant dense<0.000000e+00> : vector<128xf32>
    %40 = vector.multi_reduction <add>, %39, %cst_33 [0] : vector<16x128xf32> to vector<128xf32>
    %41 = vector.shape_cast %40 : vector<128xf32> to vector<1x128xf32>
    %42 = arith.addf %38, %41 : vector<1x128xf32>
    %c0_34 = arith.constant 0 : index
    %c1_35 = arith.constant 1 : index
    %c0_36 = arith.constant 0 : index
    %43 = vector.load %arg10[%c0_34, %c1_35, %c0_36] : memref<1x2x128xf32, #tpu.memory_space<vmem>>, vector<1x1x128xf32>
    %44 = vector.shape_cast %43 : vector<1x1x128xf32> to vector<1x128xf32>
    %45 = vector.shape_cast %42 : vector<1x128xf32> to vector<1x1x128xf32>
    tpu.vector_store %arg10[%c0_34, %c1_35, %c0_36], %45 {strides = array<i32>} : memref<1x2x128xf32, #tpu.memory_space<vmem>>, vector<1x1x128xf32>,
    return
  }
  func.func @transform_0(%arg0: i32, %arg1: i32) -> (i32, i32, i32) {
    %c0_i32 = arith.constant 0 : i32
    %c0_i32_0 = arith.constant 0 : i32
    return %arg0, %arg1, %c0_i32 : i32, i32, i32
  }
  func.func @transform_1(%arg0: i32, %arg1: i32) -> (i32, i32, i32) {
    %c0_i32 = arith.constant 0 : i32
    %c0_i32_0 = arith.constant 0 : i32
    %c0_i32_1 = arith.constant 0 : i32
    return %arg0, %c0_i32, %c0_i32_0 : i32, i32, i32
  }
  func.func @transform_2(%arg0: i32, %arg1: i32) -> (i32, i32, i32) {
    %c0_i32 = arith.constant 0 : i32
    %c0_i32_0 = arith.constant 0 : i32
    return %arg0, %arg1, %c0_i32 : i32, i32, i32
  }
  func.func @transform_3(%arg0: i32, %arg1: i32) -> (i32, i32, i32) {
    %c0_i32 = arith.constant 0 : i32
    %c0_i32_0 = arith.constant 0 : i32
    %c0_i32_1 = arith.constant 0 : i32
    return %arg0, %c0_i32, %c0_i32_0 : i32, i32, i32
  }
  func.func @transform_4(%arg0: i32, %arg1: i32) -> (i32, i32, i32) {
    %c0_i32 = arith.constant 0 : i32
    %c0_i32_0 = arith.constant 0 : i32
    %c0_i32_1 = arith.constant 0 : i32
    return %arg0, %c0_i32, %c0_i32_0 : i32, i32, i32
  }
  func.func @transform_5(%arg0: i32, %arg1: i32) -> (i32, i32) {
    %c0_i32 = arith.constant 0 : i32
    %c0_i32_0 = arith.constant 0 : i32
    %c0_i32_1 = arith.constant 0 : i32
    return %c0_i32, %c0_i32_0 : i32, i32
  }
  func.func @transform_6(%arg0: i32, %arg1: i32) -> (i32, i32) {
    %c0_i32 = arith.constant 0 : i32
    %c0_i32_0 = arith.constant 0 : i32
    %c0_i32_1 = arith.constant 0 : i32
    return %c0_i32, %c0_i32_0 : i32, i32
  }
  func.func @transform_7(%arg0: i32, %arg1: i32) -> (i32, i32, i32) {
    %c0_i32 = arith.constant 0 : i32
    %c0_i32_0 = arith.constant 0 : i32
    return %arg0, %arg1, %c0_i32 : i32, i32, i32
  }
  func.func @transform_8(%arg0: i32, %arg1: i32) -> (i32, i32, i32) {
    %c0_i32 = arith.constant 0 : i32
    %c0_i32_0 = arith.constant 0 : i32
    %c0_i32_1 = arith.constant 0 : i32
    return %arg0, %c0_i32, %c0_i32_0 : i32, i32, i32
  }
}

</mosaic_0001>

<llo_original>
// kernel: cr_layer.3
$region0: #{cr_layer.3}
  #allocation0 [shape = 'u32[]', space=smem, size = 0x4, offset = 0x4, fixed_abs, tag = 'smem constant byte address 0x4 - core index']
  #allocation1 [shape = 'u32[72,128]{1,0:T(1,128)}', space=vmem, size = 0x9000, scoped, tag = 'internal scratch']
  %s0 = inlined_call_operand.vmem [shape: f32[2,16,8], index: 0, kind: input, shape index: {}]
  %s1 = inlined_call_operand.vmem [shape: f32[2,16,128], index: 1, kind: input, shape index: {}]
  %s2 = inlined_call_operand.vmem [shape: f32[2,8,128], index: 2, kind: output, shape index: {0}]
  %s3 = inlined_call_operand.vmem [shape: f32[2,8,8], index: 3, kind: output, shape index: {1}]
  %s4 = inlined_call_operand.vmem [shape: f32[2,2,128], index: 4, kind: output, shape index: {2}]
  %s5 = inlined_call_operand.vmem [shape: f32[2,1,8], index: 5, kind: output, shape index: {3}]
  %6 = xla_tuple %s2, %s3, %s4, %s5
  %s7 = sld [smem:[#allocation0]]
  $region69: #{cr_layer.3} parent=0
    _
  %s9 = ssub.s32 1, %s7
  %s10 = scalar_select 0, %s9, %s7
  loop: start=0, step=1, limit=4
  $region2: #{cr_layer.3} parent=0 // loop_pre_header
    _
  $region3: #{cr_layer.3} parent=0 // loop_header
    %s12 = sphi 0, %s16
    %p13 = scmp.ge.s32.totalorder %s12, 4
    %s19 = sphi 0, %s31
    %s20 = sphi 0, %s27
    %s21 = sphi 0, %s19
    %s22 = sphi 0, %s20
    %s23 = sphi 0, %s21
    %s24 = sphi 0, %s22
    %s36 = sphi 0, %s38
    %s39 = sphi 0, %s36
    %s40 = sphi 0, %s39
    %s56 = sphi 0, %s40
    %s64 = sphi 0, %s66
    %s67 = sphi 0, %s64
    %s68 = sphi 0, %s67
    %s84 = sphi 0, %s68
    %s90 = sphi 0, %s92
    %s93 = sphi 0, %s90
    %s94 = sphi 0, %s93
    %s110 = sphi 0, %s94
    %s116 = sphi 0, %s118
    %s119 = sphi 0, %s116
    %s120 = sphi 0, %s119
    %s136 = sphi 0, %s120
    %s142 = sphi 0, %s144
    %s145 = sphi 0, %s142
    %s146 = sphi 0, %s145
    %s162 = sphi 0, %s146
    %s168 = sphi 0, %s170
    %s171 = sphi 0, %s168
    %s172 = sphi 0, %s171
    %s188 = sphi 0, %s172
  $region4: #{cr_layer.3} parent=0 // loop_header_branch
    %15 = sbr.rel (%p13) target = $region8
  $region5: #{cr_layer.3} parent=0 // loop_body
    %s17 = ssub.s32 %s12, 1
    %s18 = ssub.s32 %s12, 2
    %s25 = sadd.s32 1, %s20
    %p26 = scmp.ge.s32.totalorder %s25, 1
    %s27 = scalar_select %p26, 0, %s25
    %s28 = sadd.s32 1, %s19
    %s29 = scalar_select %p26, %s28, %s19
    %p30 = scmp.ge.s32.totalorder %s29, 2
    %s31 = scalar_select %p30, 0, %s29
    %s32 = ssub.s32 %s19, %s31
    %s33 = ssub.s32 %s20, %s27
    %s34 = sor.u32 %s32, %s33
    %p35 = scmp.eq.s32.totalorder %s34, 0
    %s37 = sadd.s32 %s36, 1
    %s38 = scalar_select %p35, %s36, %s37
    %p41 = pneg %p35
    %p42 = scmp.eq.s32.totalorder %s12, 1
    %p43 = por %p41, %p42
    %p44 = scmp.ne.s32.totalorder %s36, %s39
    %p45 = scmp.eq.s32.totalorder %s12, 0
    %p46 = por %p44, %p45
    %p47 = scmp.ne.s32.totalorder %s36, %s39
    %p48 = scmp.eq.s32.totalorder %s17, 1
    %p49 = por %p47, %p48
    %p50 = scmp.ne.s32.totalorder %s39, %s40
    %p51 = scmp.eq.s32.totalorder %s17, 0
    %p52 = por %p50, %p51
    %p53 = scmp.ne.s32.totalorder %s39, %s40
    %p54 = scmp.eq.s32.totalorder %s18, 1
    %p55 = por %p53, %p54
    %p57 = scmp.ne.s32.totalorder %s40, %s56
    %p58 = scmp.eq.s32.totalorder %s18, 0
    %p59 = por %p57, %p58
    %s60 = ssub.s32 %s19, %s31
    %s61 = ssub.s32 %s20, %s27
    %s62 = sor.u32 %s60, %s61
    %p63 = scmp.eq.s32.totalorder %s62, 0
    %s65 = sadd.s32 %s64, 1
    %s66 = scalar_select %p63, %s64, %s65
    %p69 = pneg %p63
    %p70 = scmp.eq.s32.totalorder %s12, 1
    %p71 = por %p69, %p70
    %p72 = scmp.ne.s32.totalorder %s64, %s67
    %p73 = scmp.eq.s32.totalorder %s12, 0
    %p74 = por %p72, %p73
    %p75 = scmp.ne.s32.totalorder %s64, %s67
    %p76 = scmp.eq.s32.totalorder %s17, 1
    %p77 = por %p75, %p76
    %p78 = scmp.ne.s32.totalorder %s67, %s68
    %p79 = scmp.eq.s32.totalorder %s17, 0
    %p80 = por %p78, %p79
    %p81 = scmp.ne.s32.totalorder %s67, %s68
    %p82 = scmp.eq.s32.totalorder %s18, 1
    %p83 = por %p81, %p82
    %p85 = scmp.ne.s32.totalorder %s68, %s84
    %p86 = scmp.eq.s32.totalorder %s18, 0
    %p87 = por %p85, %p86
    %s88 = ssub.s32 %s19, %s31
    %p89 = scmp.eq.s32.totalorder %s88, 0
    %s91 = sadd.s32 %s90, 1
    %s92 = scalar_select %p89, %s90, %s91
    %p95 = pneg %p89
    %p96 = scmp.eq.s32.totalorder %s12, 1
    %p97 = por %p95, %p96
    %p98 = scmp.ne.s32.totalorder %s90, %s93
    %p99 = scmp.eq.s32.totalorder %s12, 0
    %p100 = por %p98, %p99
    %p101 = scmp.ne.s32.totalorder %s90, %s93
    %p102 = scmp.eq.s32.totalorder %s17, 1
    %p103 = por %p101, %p102
    %p104 = scmp.ne.s32.totalorder %s93, %s94
    %p105 = scmp.eq.s32.totalorder %s17, 0
    %p106 = por %p104, %p105
    %p107 = scmp.ne.s32.totalorder %s93, %s94
    %p108 = scmp.eq.s32.totalorder %s18, 1
    %p109 = por %p107, %p108
    %p111 = scmp.ne.s32.totalorder %s94, %s110
    %p112 = scmp.eq.s32.totalorder %s18, 0
    %p113 = por %p111, %p112
    %s114 = ssub.s32 %s19, %s31
    %p115 = scmp.eq.s32.totalorder %s114, 0
    %s117 = sadd.s32 %s116, 1
    %s118 = scalar_select %p115, %s116, %s117
    %p121 = pneg %p115
    %p122 = scmp.eq.s32.totalorder %s12, 1
    %p123 = por %p121, %p122
    %p124 = scmp.ne.s32.totalorder %s116, %s119
    %p125 = scmp.eq.s32.totalorder %s12, 0
    %p126 = por %p124, %p125
    %p127 = scmp.ne.s32.totalorder %s116, %s119
    %p128 = scmp.eq.s32.totalorder %s17, 1
    %p129 = por %p127, %p128
    %p130 = scmp.ne.s32.totalorder %s119, %s120
    %p131 = scmp.eq.s32.totalorder %s17, 0
    %p132 = por %p130, %p131
    %p133 = scmp.ne.s32.totalorder %s119, %s120
    %p134 = scmp.eq.s32.totalorder %s18, 1
    %p135 = por %p133, %p134
    %p137 = scmp.ne.s32.totalorder %s120, %s136
    %p138 = scmp.eq.s32.totalorder %s18, 0
    %p139 = por %p137, %p138
    %s140 = ssub.s32 %s19, %s31
    %p141 = scmp.eq.s32.totalorder %s140, 0
    %s143 = sadd.s32 %s142, 1
    %s144 = scalar_select %p141, %s142, %s143
    %p147 = pneg %p141
    %p148 = scmp.eq.s32.totalorder %s12, 1
    %p149 = por %p147, %p148
    %p150 = scmp.ne.s32.totalorder %s142, %s145
    %p151 = scmp.eq.s32.totalorder %s12, 0
    %p152 = por %p150, %p151
    %p153 = scmp.ne.s32.totalorder %s142, %s145
    %p154 = scmp.eq.s32.totalorder %s17, 1
    %p155 = por %p153, %p154
    %p156 = scmp.ne.s32.totalorder %s145, %s146
    %p157 = scmp.eq.s32.totalorder %s17, 0
    %p158 = por %p156, %p157
    %p159 = scmp.ne.s32.totalorder %s145, %s146
    %p160 = scmp.eq.s32.totalorder %s18, 1
    %p161 = por %p159, %p160
    %p163 = scmp.ne.s32.totalorder %s146, %s162
    %p164 = scmp.eq.s32.totalorder %s18, 0
    %p165 = por %p163, %p164
    %s166 = ssub.s32 %s19, %s31
    %p167 = scmp.eq.s32.totalorder %s166, 0
    %s169 = sadd.s32 %s168, 1
    %s170 = scalar_select %p167, %s168, %s169
    %p173 = pneg %p167
    %p174 = scmp.eq.s32.totalorder %s12, 1
    %p175 = por %p173, %p174
    %p176 = scmp.ne.s32.totalorder %s168, %s171
    %p177 = scmp.eq.s32.totalorder %s12, 0
    %p178 = por %p176, %p177
    %p179 = scmp.ne.s32.totalorder %s168, %s171
    %p180 = scmp.eq.s32.totalorder %s17, 1
    %p181 = por %p179, %p180
    %p182 = scmp.ne.s32.totalorder %s171, %s172
    %p183 = scmp.eq.s32.totalorder %s17, 0
    %p184 = por %p182, %p183
    %p185 = scmp.ne.s32.totalorder %s171, %s172
    %p186 = scmp.eq.s32.totalorder %s18, 1
    %p187 = por %p185, %p186
    %p189 = scmp.ne.s32.totalorder %s172, %s188
    %p190 = scmp.eq.s32.totalorder %s18, 0
    %p191 = por %p189, %p190
    %p192 = scmp.le.s32.totalorder 1, %s12
    %p193 = scmp.lt.s32.totalorder %s12, 3
    %p194 = pnand %p192, %p193
    %p195 = pneg %p194
    // Predicated region
    $region9: #{cr_layer.3} parent=5 // pred_check
      _
    $region10: #{cr_layer.3} parent=5 // pred_check_branch
      %197 = sbr.rel (%p194) target = $region12
    $region11: #{cr_layer.3} parent=5 // pred_region
      %s198 = ssub.s32 %s12, 1
    $region12: #{cr_layer.3} parent=5 // pred_fallthru
      _
    %p199 = scmp.lt.s32.totalorder %s12, 2
    // Predicated region
    $region13: #{cr_layer.3} parent=5 // pred_check
      %p200 = pneg %p199
    $region14: #{cr_layer.3} parent=5 // pred_check_branch
      %202 = sbr.rel (%p200) target = $region16
    $region15: #{cr_layer.3} parent=5 // pred_region
      // Predicated region
      $region17: #{cr_layer.3} parent=15 // pred_check
        %p203 = pneg %p46
      $region18: #{cr_layer.3} parent=15 // pred_check_branch
        %205 = sbr.rel (%p203) target = $region20
      $region19: #{cr_layer.3} parent=15 // pred_region
        %s206 = smul.u32 2, %s20
        %p207 = scmp.lt.s32.totalorder %s19, 1
        %s208 = scalar_select %p207, %s19, 1
        %p209 = scmp.lt.s32.totalorder %s206, 1
        %s210 = scalar_select %p209, %s206, 1
        %s211 = smul.addr %s208, 2
        %s212 = sadd.s32 %s210, %s211
        %s213 = smul.addr %s212, 8
        %s214 = scalar_lea.vmem %s0, %s213
        %s215 = smul.u32 2, %s20
      $region20: #{cr_layer.3} parent=15 // pred_fallthru
        _
      // Predicated region
      $region21: #{cr_layer.3} parent=15 // pred_check
        %p216 = pneg %p74
      $region22: #{cr_layer.3} parent=15 // pred_check_branch
        %218 = sbr.rel (%p216) target = $region24
      $region23: #{cr_layer.3} parent=15 // pred_region
        %s219 = smul.u32 2, %s20
        %p220 = scmp.lt.s32.totalorder %s19, 1
        %s221 = scalar_select %p220, %s19, 1
        %p222 = scmp.lt.s32.totalorder %s219, 1
        %s223 = scalar_select %p222, %s219, 1
        %s224 = smul.addr %s221, 2
        %s225 = sadd.s32 %s223, %s224
        %s226 = smul.addr %s225, 8
        %s227 = scalar_lea.vmem %s1, %s226
        %s228 = smul.u32 2, %s20
      $region24: #{cr_layer.3} parent=15 // pred_fallthru
        _
    $region16: #{cr_layer.3} parent=5 // pred_fallthru
      _
    %p229 = scmp.le.s32.totalorder 1, %s12
    %p230 = scmp.lt.s32.totalorder %s12, 3
    %p231 = pnand %p229, %p230
    %p232 = pneg %p231
    // Predicated region
    $region25: #{cr_layer.3} parent=5 // pred_check
      _
    $region26: #{cr_layer.3} parent=5 // pred_check_branch
      %234 = sbr.rel (%p231) target = $region28
    $region27: #{cr_layer.3} parent=5 // pred_region
      %s235 = ssub.s32 %s12, 1
      %s236 = smul.u32 2, %s22
      %p237 = scmp.lt.s32.totalorder %s21, 1
      %s238 = scalar_select %p237, %s21, 1
      %p239 = scmp.lt.s32.totalorder %s236, 1
      %s240 = scalar_select %p239, %s236, 1
      %s241 = smul.addr %s238, 2
      %s242 = sadd.s32 %s240, %s241
      %s243 = smul.addr %s242, 8
      %s244 = scalar_lea.vmem %s0, %s243
      %p245 = pneg %p52
      %p246 = pneg %p49
      %s247 = smul.u32 2, %s22
      %p248 = scmp.lt.s32.totalorder %s21, 1
      %s249 = scalar_select %p248, %s21, 1
      %p250 = scmp.lt.s32.totalorder %s247, 1
      %s251 = scalar_select %p250, %s247, 1
      %s252 = smul.addr %s249, 2
      %s253 = sadd.s32 %s251, %s252
      %s254 = smul.addr %s253, 8
      %s255 = scalar_lea.vmem %s1, %s254
      %p256 = pneg %p80
      %p257 = pneg %p77
      %p258 = pneg %p106
      %p259 = pneg %p103
      %p260 = scmp.lt.s32.totalorder %s21, 1
      %s261 = scalar_select %p260, %s21, 1
      %s262 = smul.addr %s261, 8
      %s263 = scalar_lea.vmem %s2, %s262
      %p264 = pneg %p132
      %p265 = pneg %p129
      %p266 = scmp.lt.s32.totalorder %s21, 1
      %s267 = scalar_select %p266, %s21, 1
      %s268 = smul.addr %s267, 8
      %s269 = scalar_lea.vmem %s3, %s268
      %p270 = pneg %p158
      %p271 = pneg %p155
      %p272 = scmp.lt.s32.totalorder %s21, 1
      %s273 = scalar_select %p272, %s21, 1
      %s274 = smul.addr %s273, 2
      %s275 = scalar_lea.vmem %s4, %s274
      %p276 = pneg %p184
      %p277 = pneg %p181
      %p278 = scmp.lt.s32.totalorder %s21, 1
      %s279 = scalar_select %p278, %s21, 1
      %s280 = scalar_lea.vmem %s5, %s279
      %s281 = smul.u32 2, %s22
      %p282 = scmp.lt.s32.totalorder %s21, 1
      %s283 = scalar_select %p282, %s21, 1
      %p284 = scmp.lt.s32.totalorder %s281, 1
      %s285 = scalar_select %p284, %s281, 1
      %s286 = smul.addr %s283, 2
      %s287 = sadd.s32 %s285, %s286
      %s288 = smul.addr %s287, 8
      %s289 = scalar_lea.vmem %s0, %s288
      %s290 = smul.u32 2, %s22
      %s291 = smul.u32 2, %s22
      %p292 = scmp.lt.s32.totalorder %s21, 1
      %s293 = scalar_select %p292, %s21, 1
      %p294 = scmp.lt.s32.totalorder %s291, 1
      %s295 = scalar_select %p294, %s291, 1
      %s296 = smul.addr %s293, 2
      %s297 = sadd.s32 %s295, %s296
      %s298 = smul.addr %s297, 8
      %s299 = scalar_lea.vmem %s1, %s298
      %s300 = smul.u32 2, %s22
      %p301 = scmp.lt.s32.totalorder %s21, 1
      %s302 = scalar_select %p301, %s21, 1
      %s303 = smul.addr %s302, 8
      %s304 = scalar_lea.vmem %s2, %s303
      %p305 = scmp.lt.s32.totalorder %s21, 1
      %s306 = scalar_select %p305, %s21, 1
      %s307 = smul.addr %s306, 8
      %s308 = scalar_lea.vmem %s3, %s307
      %p309 = scmp.lt.s32.totalorder %s21, 1
      %s310 = scalar_select %p309, %s21, 1
      %s311 = smul.addr %s310, 2
      %s312 = scalar_lea.vmem %s4, %s311
      %p313 = scmp.lt.s32.totalorder %s21, 1
      %s314 = scalar_select %p313, %s21, 1
      %s315 = scalar_lea.vmem %s5, %s314
      %p316 = scmp.eq.s32.totalorder %s22, 0
      // Predicated region
      $region29: #{cr_layer.3} parent=27 // pred_check
        %p317 = pneg %p316
      $region30: #{cr_layer.3} parent=27 // pred_check_branch
        %319 = sbr.rel (%p317) target = $region32
      $region31: #{cr_layer.3} parent=27 // pred_region
        %320 = vst [vmem:[%s304] sm:$0xff] 0.0
        %vm321 = vcmask 64512
        %322 = vst.msk [vmem:[%s308] sm:$0xff] %vm321, 0.0
        %323 = vst [vmem:[%s312] sm:$0x3] 0.0
        %vm324 = vcmask 57344
        %325 = vst.msk [vmem:[%s315] sm:$0x1] %vm324, 0.0
      $region32: #{cr_layer.3} parent=27 // pred_fallthru
        _
      %v326 = vld [vmem:[%s289] sm:$0xff]
      %v327 = vld [vmem:[%s289 + $0x8] sm:$0xff]
      %v328 = vld [vmem:[%s299] sm:$0xff]
      %v329 = vld [vmem:[%s299 + $0x8] sm:$0xff]
      %v330 = vld [vmem:[%s304] sm:$0xff]
      %331 = vxpose.xlu0.b32.start [1/16] %v326, 128
      %332 = vxpose.xlu0.b32.cont [2/16] %v327, 128
      %333 = vxpose.xlu0.b32.cont [3/16] 0.0, 128
      %334 = vxpose.xlu0.b32.cont [4/16] 0.0, 128
      %335 = vxpose.xlu0.b32.cont [5/16] 0.0, 128
      %336 = vxpose.xlu0.b32.cont [6/16] 0.0, 128
      %337 = vxpose.xlu0.b32.cont [7/16] 0.0, 128
      %338 = vxpose.xlu0.b32.cont [8/16] 0.0, 128
      %339 = vxpose.xlu0.b32.cont [9/16] 0.0, 128
      %340 = vxpose.xlu0.b32.cont [10/16] 0.0, 128
      %341 = vxpose.xlu0.b32.cont [11/16] 0.0, 128
      %342 = vxpose.xlu0.b32.cont [12/16] 0.0, 128
      %343 = vxpose.xlu0.b32.cont [13/16] 0.0, 128
      %344 = vxpose.xlu0.b32.cont [14/16] 0.0, 128
      %345 = vxpose.xlu0.b32.cont [15/16] 0.0, 128
      %346 = vxpose.xlu0.b32.end [16/16] 0.0, 128
      %v347 = vpop.trf.xlu0
      %v348 = vpop.trf.xlu0
      %v349 = vpop.trf.xlu0
      %v350 = vpop.trf.xlu0
      %v351 = vpop.trf.xlu0
      %v352 = vpop.trf.xlu0
      %v353 = vpop.trf.xlu0
      %v354 = vpop.trf.xlu0
      %v355 = vpop.trf.xlu0
      %v356 = vpop.trf.xlu0
      %v357 = vpop.trf.xlu0
      %v358 = vpop.trf.xlu0
      %v359 = vpop.trf.xlu0
      %v360 = vpop.trf.xlu0
      %v361 = vpop.trf.xlu0
      %v362 = vpop.trf.xlu0
      %vm363 = vcmask 130048
      %v365 = vsel %vm363, %v347, 0
      %367 = vmatpush.msra.mxu0 0.0
      %368 = vmatpush.msra.mxu0 0.0
      %369 = vmatpush.msra.mxu0 0.0
      %370 = vmatpush.msra.mxu0 0.0
      %371 = vmatpush.msra.mxu0 0.0
      %372 = vmatpush.msra.mxu0 0.0
      %373 = vmatpush.msra.mxu0 0.0
      %374 = vmatpush.msra.mxu0 0.0
      %375 = vmatpush.msra.mxu0 0.0
      %376 = vmatpush.msra.mxu0 0.0
      %377 = vmatpush.msra.mxu0 0.0
      %378 = vmatpush.msra.mxu0 0.0
      %379 = vmatpush.msra.mxu0 0.0
      %380 = vmatpush.msra.mxu0 0.0
      %381 = vmatpush.msra.mxu0 %v329
      %382 = vmatpush.msra.mxu0 %v328
      %383 = vmatmul.f32.gmra.mxu0 %v365
      %v384 = vpop.f32.mrf.mxu0
      %v385 = vadd.f32 0.0, %v384
      %386 = vdwg.mxu0
      %v387 = vadd.f32 %v330, %v385
      %388 = vst [vmem:[%s304] sm:$0xff] %v387
      %v389 = vld [vmem:[%s308] sm:$0xff]
      %390 = vmatpush.msra.mxu0 0.0
      %391 = vmatpush.msra.mxu0 0.0
      %392 = vmatpush.msra.mxu0 0.0
      %393 = vmatpush.msra.mxu0 0.0
      %394 = vmatpush.msra.mxu0 0.0
      %395 = vmatpush.msra.mxu0 0.0
      %396 = vmatpush.msra.mxu0 0.0
      %397 = vmatpush.msra.mxu0 0.0
      %398 = vmatpush.msra.mxu0 0.0
      %399 = vmatpush.msra.mxu0 0.0
      %400 = vmatpush.msra.mxu0 0.0
      %401 = vmatpush.msra.mxu0 0.0
      %402 = vmatpush.msra.mxu0 0.0
      %403 = vmatpush.msra.mxu0 0.0
      %404 = vmatpush.msra.mxu0 %v327
      %405 = vmatpush.msra.mxu0 %v326
      %406 = vmatmul.f32.gmra.mxu0 %v365
      %v407 = vpop.f32.mrf.mxu0
      %v408 = vadd.f32 0.0, %v407
      %409 = vdwg.mxu0
      %v410 = vadd.f32 %v389, %v408
      %vm411 = vcmask 64512
      %412 = vst.msk [vmem:[%s308] sm:$0xff] %vm411, %v410
      %v413 = vld [vmem:[%s312] sm:$0x1]
      %v414 = vadd.f32 %v328, %v329
      %v415 = vrot.slane %v414, 4
      %v416 = vadd.f32 %v414, %v415
      %v417 = vrot.slane %v416, 2
      %v418 = vadd.f32 %v416, %v417
      %v419 = vrot.slane %v418, 1
      %v420 = vadd.f32 %v418, %v419
      %v421 = vadd.f32 %v413, %v420
      %422 = vst [vmem:[%s312] sm:$0x1] %v421
      %v423 = vld [vmem:[%s312 + $0x1] sm:$0x1]
      %v424 = vmul.f32 %v328, %v328
      %v425 = vmul.f32 %v329, %v329
      %v426 = vadd.f32 %v424, %v425
      %v427 = vrot.slane %v426, 4
      %v428 = vadd.f32 %v426, %v427
      %v429 = vrot.slane %v428, 2
      %v430 = vadd.f32 %v428, %v429
      %v431 = vrot.slane %v430, 1
      %v432 = vadd.f32 %v430, %v431
      %v433 = vadd.f32 %v423, %v432
      %434 = vst [vmem:[%s312 + $0x1] sm:$0x1] %v433
      %v435 = vld [vmem:[%s315] sm:$0x1]
      %v436 = vsel %vm411, %v326, 0.0
      %v437 = vsel %vm411, %v327, 0.0
      %v438 = vadd.f32 %v436, %v437
      %v439 = vrot.slane %v438, 4
      %v440 = vadd.f32 %v438, %v439
      %v441 = vrot.slane %v440, 2
      %v442 = vadd.f32 %v440, %v441
      %v443 = vrot.slane %v442, 1
      %v444 = vadd.f32 %v442, %v443
      %v445 = vadd.f32 %v435, %v444
      %vm446 = vcmask 57344
      %447 = vst.msk [vmem:[%s315] sm:$0x1] %vm446, %v445
      %p448 = scmp.lt.s32.totalorder %s21, 1
      %s449 = scalar_select %p448, %s21, 1
      %s450 = smul.addr %s449, 8
      %s451 = scalar_lea.vmem %s2, %s450
      %p452 = scmp.lt.s32.totalorder %s21, 1
      %s453 = scalar_select %p452, %s21, 1
      %s454 = smul.addr %s453, 8
      %s455 = scalar_lea.vmem %s3, %s454
      %p456 = scmp.lt.s32.totalorder %s21, 1
      %s457 = scalar_select %p456, %s21, 1
      %s458 = smul.addr %s457, 2
      %s459 = scalar_lea.vmem %s4, %s458
      %p460 = scmp.lt.s32.totalorder %s21, 1
      %s461 = scalar_select %p460, %s21, 1
      %s462 = scalar_lea.vmem %s5, %s461
      // Predicated region
      $region33: #{cr_layer.3} parent=27 // pred_check
        %p463 = pneg %p103
      $region34: #{cr_layer.3} parent=27 // pred_check_branch
        %465 = sbr.rel (%p463) target = $region36
      $region35: #{cr_layer.3} parent=27 // pred_region
        _
      $region36: #{cr_layer.3} parent=27 // pred_fallthru
        _
      // Predicated region
      $region37: #{cr_layer.3} parent=27 // pred_check
        %p466 = pneg %p129
      $region38: #{cr_layer.3} parent=27 // pred_check_branch
        %468 = sbr.rel (%p466) target = $region40
      $region39: #{cr_layer.3} parent=27 // pred_region
        _
      $region40: #{cr_layer.3} parent=27 // pred_fallthru
        _
      // Predicated region
      $region41: #{cr_layer.3} parent=27 // pred_check
        %p469 = pneg %p155
      $region42: #{cr_layer.3} parent=27 // pred_check_branch
        %471 = sbr.rel (%p469) target = $region44
      $region43: #{cr_layer.3} parent=27 // pred_region
        _
      $region44: #{cr_layer.3} parent=27 // pred_fallthru
        _
      // Predicated region
      $region45: #{cr_layer.3} parent=27 // pred_check
        %p472 = pneg %p181
      $region46: #{cr_layer.3} parent=27 // pred_check_branch
        %474 = sbr.rel (%p472) target = $region48
      $region47: #{cr_layer.3} parent=27 // pred_region
        _
      $region48: #{cr_layer.3} parent=27 // pred_fallthru
        _
    $region28: #{cr_layer.3} parent=5 // pred_fallthru
      _
    %p475 = scmp.le.s32.totalorder 2, %s12
    // Predicated region
    $region49: #{cr_layer.3} parent=5 // pred_check
      %p476 = pneg %p475
    $region50: #{cr_layer.3} parent=5 // pred_check_branch
      %478 = sbr.rel (%p476) target = $region52
    $region51: #{cr_layer.3} parent=5 // pred_region
      %s479 = ssub.s32 %s12, 2
      // Predicated region
      $region53: #{cr_layer.3} parent=51 // pred_check
        %p480 = pneg %p109
      $region54: #{cr_layer.3} parent=51 // pred_check_branch
        %482 = sbr.rel (%p480) target = $region56
      $region55: #{cr_layer.3} parent=51 // pred_region
        %p483 = scmp.lt.s32.totalorder %s23, 1
        %s484 = scalar_select %p483, %s23, 1
        %s485 = smul.addr %s484, 8
        %s486 = scalar_lea.vmem %s2, %s485
      $region56: #{cr_layer.3} parent=51 // pred_fallthru
        _
      // Predicated region
      $region57: #{cr_layer.3} parent=51 // pred_check
        %p487 = pneg %p135
      $region58: #{cr_layer.3} parent=51 // pred_check_branch
        %489 = sbr.rel (%p487) target = $region60
      $region59: #{cr_layer.3} parent=51 // pred_region
        %p490 = scmp.lt.s32.totalorder %s23, 1
        %s491 = scalar_select %p490, %s23, 1
        %s492 = smul.addr %s491, 8
        %s493 = scalar_lea.vmem %s3, %s492
      $region60: #{cr_layer.3} parent=51 // pred_fallthru
        _
      // Predicated region
      $region61: #{cr_layer.3} parent=51 // pred_check
        %p494 = pneg %p161
      $region62: #{cr_layer.3} parent=51 // pred_check_branch
        %496 = sbr.rel (%p494) target = $region64
      $region63: #{cr_layer.3} parent=51 // pred_region
        %p497 = scmp.lt.s32.totalorder %s23, 1
        %s498 = scalar_select %p497, %s23, 1
        %s499 = smul.addr %s498, 2
        %s500 = scalar_lea.vmem %s4, %s499
      $region64: #{cr_layer.3} parent=51 // pred_fallthru
        _
      // Predicated region
      $region65: #{cr_layer.3} parent=51 // pred_check
        %p501 = pneg %p187
      $region66: #{cr_layer.3} parent=51 // pred_check_branch
        %503 = sbr.rel (%p501) target = $region68
      $region67: #{cr_layer.3} parent=51 // pred_region
        %p504 = scmp.lt.s32.totalorder %s23, 1
        %s505 = scalar_select %p504, %s23, 1
        %s506 = scalar_lea.vmem %s5, %s505
      $region68: #{cr_layer.3} parent=51 // pred_fallthru
        _
    $region52: #{cr_layer.3} parent=5 // pred_fallthru
      _
  $region6: #{cr_layer.3} parent=0 // loop_footer
    %s16 = sadd.s32 1, %s12
  $region7: #{cr_layer.3} parent=0 // loop_footer_branch
    %11 = sbr.rel target = $region3
  $region8: #{cr_layer.3} parent=0 // loop_exit
    _

// kernel: cr_layer.5
$region0: #{cr_layer.5}
  #allocation0 [shape = 'u32[]', space=smem, size = 0x4, offset = 0x4, fixed_abs, tag = 'smem constant byte address 0x4 - core index']
  #allocation1 [shape = 'u32[72,128]{1,0:T(1,128)}', space=vmem, size = 0x9000, scoped, tag = 'internal scratch']
  %s0 = inlined_call_operand.vmem [shape: f32[2,16,128], index: 0, kind: input, shape index: {}]
  %s1 = inlined_call_operand.vmem [shape: f32[2,1,128], index: 1, kind: input, shape index: {}]
  %s2 = inlined_call_operand.vmem [shape: f32[2,1,128], index: 2, kind: input, shape index: {}]
  %s3 = inlined_call_operand.vmem [shape: f32[128,128], index: 3, kind: input, shape index: {}]
  %s4 = inlined_call_operand.vmem [shape: f32[1,128], index: 4, kind: input, shape index: {}]
  %s5 = inlined_call_operand.hbm [shape: f32[2,16,128], index: 5, kind: output, shape index: {}]
  %s6 = sld [smem:[#allocation0]]
  $region53: #{cr_layer.5} parent=0
    _
  %s8 = ssub.s32 1, %s6
  %s9 = scalar_select 0, %s8, %s6
  $region1: #{cr_layer.5} parent=0
    #allocation2 [shape = 'u8[16384]{0}', space=vmem, size = 0x4000, scoped, tag = 'output window, operand 0']
    #allocation3 [shape = 's32[2]{0}', space=sflag, size = 0x8, scoped, tag = 'scoped memory for cr_layer.5']
    %10 = vsyncpa [#allocation3], 0
    %s11 = scalar_lea.sflag [#allocation3], 1
    %12 = vsyncpa %s11, 0
    loop: start=0, step=1, limit=4
    $region2: #{cr_layer.5} parent=1 // loop_pre_header
      _
    $region3: #{cr_layer.5} parent=1 // loop_header
      %s14 = sphi 0, %s18
      %p15 = scmp.ge.s32.totalorder %s14, 4
      %s21 = sphi 0, %s33
      %s22 = sphi 0, %s29
      %s23 = sphi 0, %s21
      %s24 = sphi 0, %s22
      %s25 = sphi 0, %s23
      %s26 = sphi 0, %s24
      %s38 = sphi 0, %s40
      %s41 = sphi 0, %s38
      %s42 = sphi 0, %s41
      %s58 = sphi 0, %s42
      %s64 = sphi 0, %s66
      %s67 = sphi 0, %s64
      %s68 = sphi 0, %s67
      %s84 = sphi 0, %s68
      %s90 = sphi 0, %s92
      %s93 = sphi 0, %s90
      %s94 = sphi 0, %s93
      %s110 = sphi 0, %s94
      %s114 = sphi 0, %s114
      %s116 = sphi 0, %s114
      %s117 = sphi 0, %s116
      %s131 = sphi 0, %s117
      %s135 = sphi 0, %s135
      %s137 = sphi 0, %s135
      %s138 = sphi 0, %s137
      %s152 = sphi 0, %s138
      %s160 = sphi 0, %s162
      %s163 = sphi 0, %s160
      %s164 = sphi 0, %s163
      %s180 = sphi 0, %s164
    $region4: #{cr_layer.5} parent=1 // loop_header_branch
      %17 = sbr.rel (%p15) target = $region8
    $region5: #{cr_layer.5} parent=1 // loop_body
      %s19 = ssub.s32 %s14, 1
      %s20 = ssub.s32 %s14, 2
      %s27 = sadd.s32 1, %s22
      %p28 = scmp.ge.s32.totalorder %s27, 1
      %s29 = scalar_select %p28, 0, %s27
      %s30 = sadd.s32 1, %s21
      %s31 = scalar_select %p28, %s30, %s21
      %p32 = scmp.ge.s32.totalorder %s31, 2
      %s33 = scalar_select %p32, 0, %s31
      %s34 = ssub.s32 %s21, %s33
      %s35 = ssub.s32 %s22, %s29
      %s36 = sor.u32 %s34, %s35
      %p37 = scmp.eq.s32.totalorder %s36, 0
      %s39 = sadd.s32 %s38, 1
      %s40 = scalar_select %p37, %s38, %s39
      %p43 = pneg %p37
      %p44 = scmp.eq.s32.totalorder %s14, 1
      %p45 = por %p43, %p44
      %p46 = scmp.ne.s32.totalorder %s38, %s41
      %p47 = scmp.eq.s32.totalorder %s14, 0
      %p48 = por %p46, %p47
      %p49 = scmp.ne.s32.totalorder %s38, %s41
      %p50 = scmp.eq.s32.totalorder %s19, 1
      %p51 = por %p49, %p50
      %p52 = scmp.ne.s32.totalorder %s41, %s42
      %p53 = scmp.eq.s32.totalorder %s19, 0
      %p54 = por %p52, %p53
      %p55 = scmp.ne.s32.totalorder %s41, %s42
      %p56 = scmp.eq.s32.totalorder %s20, 1
      %p57 = por %p55, %p56
      %p59 = scmp.ne.s32.totalorder %s42, %s58
      %p60 = scmp.eq.s32.totalorder %s20, 0
      %p61 = por %p59, %p60
      %s62 = ssub.s32 %s21, %s33
      %p63 = scmp.eq.s32.totalorder %s62, 0
      %s65 = sadd.s32 %s64, 1
      %s66 = scalar_select %p63, %s64, %s65
      %p69 = pneg %p63
      %p70 = scmp.eq.s32.totalorder %s14, 1
      %p71 = por %p69, %p70
      %p72 = scmp.ne.s32.totalorder %s64, %s67
      %p73 = scmp.eq.s32.totalorder %s14, 0
      %p74 = por %p72, %p73
      %p75 = scmp.ne.s32.totalorder %s64, %s67
      %p76 = scmp.eq.s32.totalorder %s19, 1
      %p77 = por %p75, %p76
      %p78 = scmp.ne.s32.totalorder %s67, %s68
      %p79 = scmp.eq.s32.totalorder %s19, 0
      %p80 = por %p78, %p79
      %p81 = scmp.ne.s32.totalorder %s67, %s68
      %p82 = scmp.eq.s32.totalorder %s20, 1
      %p83 = por %p81, %p82
      %p85 = scmp.ne.s32.totalorder %s68, %s84
      %p86 = scmp.eq.s32.totalorder %s20, 0
      %p87 = por %p85, %p86
      %s88 = ssub.s32 %s21, %s33
      %p89 = scmp.eq.s32.totalorder %s88, 0
      %s91 = sadd.s32 %s90, 1
      %s92 = scalar_select %p89, %s90, %s91
      %p95 = pneg %p89
      %p96 = scmp.eq.s32.totalorder %s14, 1
      %p97 = por %p95, %p96
      %p98 = scmp.ne.s32.totalorder %s90, %s93
      %p99 = scmp.eq.s32.totalorder %s14, 0
      %p100 = por %p98, %p99
      %p101 = scmp.ne.s32.totalorder %s90, %s93
      %p102 = scmp.eq.s32.totalorder %s19, 1
      %p103 = por %p101, %p102
      %p104 = scmp.ne.s32.totalorder %s93, %s94
      %p105 = scmp.eq.s32.totalorder %s19, 0
      %p106 = por %p104, %p105
      %p107 = scmp.ne.s32.totalorder %s93, %s94
      %p108 = scmp.eq.s32.totalorder %s20, 1
      %p109 = por %p107, %p108
      %p111 = scmp.ne.s32.totalorder %s94, %s110
      %p112 = scmp.eq.s32.totalorder %s20, 0
      %p113 = por %p111, %p112
      %s115 = sadd.s32 %s114, 1
      %p118 = scmp.eq.s32.totalorder %s14, 1
      %p119 = scmp.ne.s32.totalorder %s114, %s116
      %p120 = scmp.eq.s32.totalorder %s14, 0
      %p121 = por %p119, %p120
      %p122 = scmp.ne.s32.totalorder %s114, %s116
      %p123 = scmp.eq.s32.totalorder %s19, 1
      %p124 = por %p122, %p123
      %p125 = scmp.ne.s32.totalorder %s116, %s117
      %p126 = scmp.eq.s32.totalorder %s19, 0
      %p127 = por %p125, %p126
      %p128 = scmp.ne.s32.totalorder %s116, %s117
      %p129 = scmp.eq.s32.totalorder %s20, 1
      %p130 = por %p128, %p129
      %p132 = scmp.ne.s32.totalorder %s117, %s131
      %p133 = scmp.eq.s32.totalorder %s20, 0
      %p134 = por %p132, %p133
      %s136 = sadd.s32 %s135, 1
      %p139 = scmp.eq.s32.totalorder %s14, 1
      %p140 = scmp.ne.s32.totalorder %s135, %s137
      %p141 = scmp.eq.s32.totalorder %s14, 0
      %p142 = por %p140, %p141
      %p143 = scmp.ne.s32.totalorder %s135, %s137
      %p144 = scmp.eq.s32.totalorder %s19, 1
      %p145 = por %p143, %p144
      %p146 = scmp.ne.s32.totalorder %s137, %s138
      %p147 = scmp.eq.s32.totalorder %s19, 0
      %p148 = por %p146, %p147
      %p149 = scmp.ne.s32.totalorder %s137, %s138
      %p150 = scmp.eq.s32.totalorder %s20, 1
      %p151 = por %p149, %p150
      %p153 = scmp.ne.s32.totalorder %s138, %s152
      %p154 = scmp.eq.s32.totalorder %s20, 0
      %p155 = por %p153, %p154
      %s156 = ssub.s32 %s21, %s33
      %s157 = ssub.s32 %s22, %s29
      %s158 = sor.u32 %s156, %s157
      %p159 = scmp.eq.s32.totalorder %s158, 0
      %s161 = sadd.s32 %s160, 1
      %s162 = scalar_select %p159, %s160, %s161
      %p165 = pneg %p159
      %p166 = scmp.eq.s32.totalorder %s14, 1
      %p167 = por %p165, %p166
      %p168 = scmp.ne.s32.totalorder %s160, %s163
      %p169 = scmp.eq.s32.totalorder %s14, 0
      %p170 = por %p168, %p169
      %p171 = scmp.ne.s32.totalorder %s160, %s163
      %p172 = scmp.eq.s32.totalorder %s19, 1
      %p173 = por %p171, %p172
      %p174 = scmp.ne.s32.totalorder %s163, %s164
      %p175 = scmp.eq.s32.totalorder %s19, 0
      %p176 = por %p174, %p175
      %p177 = scmp.ne.s32.totalorder %s163, %s164
      %p178 = scmp.eq.s32.totalorder %s20, 1
      %p179 = por %p177, %p178
      %p181 = scmp.ne.s32.totalorder %s164, %s180
      %p182 = scmp.eq.s32.totalorder %s20, 0
      %p183 = por %p181, %p182
      %p184 = scmp.le.s32.totalorder 1, %s14
      %p185 = scmp.lt.s32.totalorder %s14, 3
      %p186 = pnand %p184, %p185
      %p187 = pneg %p186
      // Predicated region
      $region9: #{cr_layer.5} parent=5 // pred_check
        _
      $region10: #{cr_layer.5} parent=5 // pred_check_branch
        %189 = sbr.rel (%p186) target = $region12
      $region11: #{cr_layer.5} parent=5 // pred_region
        %s190 = ssub.s32 %s14, 1
        // Predicated region
        $region13: #{cr_layer.5} parent=11 // pred_check
          %p191 = pneg %p127
        $region14: #{cr_layer.5} parent=11 // pred_check_branch
          %193 = sbr.rel (%p191) target = $region16
        $region15: #{cr_layer.5} parent=11 // pred_region
          _
        $region16: #{cr_layer.5} parent=11 // pred_fallthru
          _
        // Predicated region
        $region17: #{cr_layer.5} parent=11 // pred_check
          %p194 = pneg %p148
        $region18: #{cr_layer.5} parent=11 // pred_check_branch
          %196 = sbr.rel (%p194) target = $region20
        $region19: #{cr_layer.5} parent=11 // pred_region
          _
        $region20: #{cr_layer.5} parent=11 // pred_fallthru
          _
      $region12: #{cr_layer.5} parent=5 // pred_fallthru
        _
      %p197 = scmp.lt.s32.totalorder %s14, 2
      // Predicated region
      $region21: #{cr_layer.5} parent=5 // pred_check
        %p198 = pneg %p197
      $region22: #{cr_layer.5} parent=5 // pred_check_branch
        %200 = sbr.rel (%p198) target = $region24
      $region23: #{cr_layer.5} parent=5 // pred_region
        // Predicated region
        $region25: #{cr_layer.5} parent=23 // pred_check
          %p201 = pneg %p48
        $region26: #{cr_layer.5} parent=23 // pred_check_branch
          %203 = sbr.rel (%p201) target = $region28
        $region27: #{cr_layer.5} parent=23 // pred_region
          %s204 = smul.u32 2, %s22
          %p205 = scmp.lt.s32.totalorder %s21, 1
          %s206 = scalar_select %p205, %s21, 1
          %p207 = scmp.lt.s32.totalorder %s204, 1
          %s208 = scalar_select %p207, %s204, 1
          %s209 = smul.addr %s206, 2
          %s210 = sadd.s32 %s208, %s209
          %s211 = smul.addr %s210, 8
          %s212 = scalar_lea.vmem %s0, %s211
          %s213 = smul.u32 2, %s22
        $region28: #{cr_layer.5} parent=23 // pred_fallthru
          _
        // Predicated region
        $region29: #{cr_layer.5} parent=23 // pred_check
          %p214 = pneg %p74
        $region30: #{cr_layer.5} parent=23 // pred_check_branch
          %216 = sbr.rel (%p214) target = $region32
        $region31: #{cr_layer.5} parent=23 // pred_region
          %p217 = scmp.lt.s32.totalorder %s21, 1
          %s218 = scalar_select %p217, %s21, 1
          %s219 = scalar_lea.vmem %s1, %s218
        $region32: #{cr_layer.5} parent=23 // pred_fallthru
          _
        // Predicated region
        $region33: #{cr_layer.5} parent=23 // pred_check
          %p220 = pneg %p100
        $region34: #{cr_layer.5} parent=23 // pred_check_branch
          %222 = sbr.rel (%p220) target = $region36
        $region35: #{cr_layer.5} parent=23 // pred_region
          %p223 = scmp.lt.s32.totalorder %s21, 1
          %s224 = scalar_select %p223, %s21, 1
          %s225 = scalar_lea.vmem %s2, %s224
        $region36: #{cr_layer.5} parent=23 // pred_fallthru
          _
      $region24: #{cr_layer.5} parent=5 // pred_fallthru
        _
      %p226 = scmp.le.s32.totalorder 1, %s14
      %p227 = scmp.lt.s32.totalorder %s14, 3
      %p228 = pnand %p226, %p227
      %p229 = pneg %p228
      // Predicated region
      $region37: #{cr_layer.5} parent=5 // pred_check
        _
      $region38: #{cr_layer.5} parent=5 // pred_check_branch
        %231 = sbr.rel (%p228) target = $region40
      $region39: #{cr_layer.5} parent=5 // pred_region
        %s232 = ssub.s32 %s14, 1
        %s233 = smul.u32 2, %s24
        %p234 = scmp.lt.s32.totalorder %s23, 1
        %s235 = scalar_select %p234, %s23, 1
        %p236 = scmp.lt.s32.totalorder %s233, 1
        %s237 = scalar_select %p236, %s233, 1
        %s238 = smul.addr %s235, 2
        %s239 = sadd.s32 %s237, %s238
        %s240 = smul.addr %s239, 8
        %s241 = scalar_lea.vmem %s0, %s240
        %p242 = pneg %p54
        %p243 = pneg %p51
        %p244 = scmp.lt.s32.totalorder %s23, 1
        %s245 = scalar_select %p244, %s23, 1
        %s246 = scalar_lea.vmem %s1, %s245
        %p247 = pneg %p80
        %p248 = pneg %p77
        %p249 = scmp.lt.s32.totalorder %s23, 1
        %s250 = scalar_select %p249, %s23, 1
        %s251 = scalar_lea.vmem %s2, %s250
        %p252 = pneg %p106
        %p253 = pneg %p103
        %p254 = pneg %p127
        %p255 = pneg %p124
        %p256 = pneg %p148
        %p257 = pneg %p145
        %p258 = pneg %p176
        %p259 = pneg %p173
        %s260 = sand.u32 %s163, 1
        %s261 = scalar_lea.sflag [#allocation3], %s260
        %s262 = sand.u32 %s163, 1
        %s263 = smul.addr %s262, 16
        %s264 = scalar_lea.vmem [#allocation2], %s263
        %s265 = smul.u32 2, %s24
        %p266 = scmp.lt.s32.totalorder %s23, 1
        %s267 = scalar_select %p266, %s23, 1
        %p268 = scmp.lt.s32.totalorder %s265, 1
        %s269 = scalar_select %p268, %s265, 1
        %s270 = smul.addr %s267, 2
        %s271 = sadd.s32 %s269, %s270
        %s272 = smul.addr %s271, 8
        %s273 = scalar_lea.vmem %s0, %s272
        %s274 = smul.u32 2, %s24
        %p275 = scmp.lt.s32.totalorder %s23, 1
        %s276 = scalar_select %p275, %s23, 1
        %s277 = scalar_lea.vmem %s1, %s276
        %p278 = scmp.lt.s32.totalorder %s23, 1
        %s279 = scalar_select %p278, %s23, 1
        %s280 = scalar_lea.vmem %s2, %s279
        %s281 = smul.u32 2, %s24
        %v282 = vld [vmem:[%s273] sm:$0xff]
        %v283 = vld [vmem:[%s273 + $0x8] sm:$0xff]
        %v284 = vld [vmem:[%s277] sm:$0x1]
        %v286 = vperm.slane %v284, 0
        %v288 = vmul.f32 %v282, %v286
        %v289 = vmul.f32 %v283, %v286
        %v290 = vld [vmem:[%s280] sm:$0x1]
        %v292 = vperm.slane %v290, 0
        %v294 = vadd.f32 %v288, %v292
        %v295 = vadd.f32 %v289, %v292
        %v296 = vmax.f32 %v294, 0.0
        %v297 = vmax.f32 %v295, 0.0
        %v298 = vld [vmem:[%s3] sm:$0xff]
        %v299 = vld [vmem:[%s3 + $0x8] sm:$0xff]
        %v300 = vld [vmem:[%s3 + $0x10] sm:$0xff]
        %v301 = vld [vmem:[%s3 + $0x18] sm:$0xff]
        %v302 = vld [vmem:[%s3 + $0x20] sm:$0xff]
        %v303 = vld [vmem:[%s3 + $0x28] sm:$0xff]
        %v304 = vld [vmem:[%s3 + $0x30] sm:$0xff]
        %v305 = vld [vmem:[%s3 + $0x38] sm:$0xff]
        %v306 = vld [vmem:[%s3 + $0x40] sm:$0xff]
        %v307 = vld [vmem:[%s3 + $0x48] sm:$0xff]
        %v308 = vld [vmem:[%s3 + $0x50] sm:$0xff]
        %v309 = vld [vmem:[%s3 + $0x58] sm:$0xff]
        %v310 = vld [vmem:[%s3 + $0x60] sm:$0xff]
        %v311 = vld [vmem:[%s3 + $0x68] sm:$0xff]
        %v312 = vld [vmem:[%s3 + $0x70] sm:$0xff]
        %v313 = vld [vmem:[%s3 + $0x78] sm:$0xff]
        %v314 = vld [vmem:[%s4] sm:$0x1]
        %v316 = vperm.slane %v314, 0
        %318 = vmatpush.msra.mxu0 %v313
        %319 = vmatpush.msra.mxu0 %v312
        %320 = vmatpush.msra.mxu0 %v311
        %321 = vmatpush.msra.mxu0 %v310
        %322 = vmatpush.msra.mxu0 %v309
        %323 = vmatpush.msra.mxu0 %v308
        %324 = vmatpush.msra.mxu0 %v307
        %325 = vmatpush.msra.mxu0 %v306
        %326 = vmatpush.msra.mxu0 %v305
        %327 = vmatpush.msra.mxu0 %v304
        %328 = vmatpush.msra.mxu0 %v303
        %329 = vmatpush.msra.mxu0 %v302
        %330 = vmatpush.msra.mxu0 %v301
        %331 = vmatpush.msra.mxu0 %v300
        %332 = vmatpush.msra.mxu0 %v299
        %333 = vmatpush.msra.mxu0 %v298
        %334 = vmatmul.f32.gmra.mxu0 %v296
        %v335 = vpop.f32.mrf.mxu0
        %v336 = vadd.f32 %v316, %v335
        %337 = vmatmul.f32.gmra.mxu0 %v297
        %v338 = vpop.f32.mrf.mxu0
        %v339 = vadd.f32 %v316, %v338
        %340 = vdwg.mxu0
        %341 = vst [vmem:[%s264] sm:$0xff] %v336
        %342 = vst [vmem:[%s264 + $0x8] sm:$0xff] %v339
        %s343 = sand.u32 %s163, 1
        %s344 = scalar_lea.sflag [#allocation3], %s343
        %s345 = sand.u32 %s163, 1
        %s346 = smul.addr %s345, 16
        %s347 = scalar_lea.vmem [#allocation2], %s346
        // Predicated region
        $region41: #{cr_layer.5} parent=39 // pred_check
          %p348 = pneg %p173
        $region42: #{cr_layer.5} parent=39 // pred_check_branch
          %350 = sbr.rel (%p348) target = $region44
        $region43: #{cr_layer.5} parent=39 // pred_region
          %s351 = smul.u32 2, %s24
          %353 = vsyncadd %s344, 0
          %s354 = smul.addr %s23, 2
          %s355 = sadd.s32 %s351, %s354
          %s356 = smul.addr %s355, 8
          %s357 = scalar_lea.hbm %s5, %s356
          %s358 = sshll.u32 %s347, 4
          %s359 = int_to_ptr.vmem [resolvable:$true] %s358
          %s360 = sshll.u32 %s357, 4
          %s361 = int_to_ptr.hbm [resolvable:$true] %s360
          %366 = dma.vmem_to_hbm [thread:$0]  %s359, 256, %s361, %s344, 128, 128, 8
        $region44: #{cr_layer.5} parent=39 // pred_fallthru
          _
      $region40: #{cr_layer.5} parent=5 // pred_fallthru
        _
      %p367 = scmp.le.s32.totalorder 2, %s14
      // Predicated region
      $region45: #{cr_layer.5} parent=5 // pred_check
        %p368 = pneg %p367
      $region46: #{cr_layer.5} parent=5 // pred_check_branch
        %370 = sbr.rel (%p368) target = $region48
      $region47: #{cr_layer.5} parent=5 // pred_region
        %s371 = ssub.s32 %s14, 2
        // Predicated region
        $region49: #{cr_layer.5} parent=47 // pred_check
          %p372 = pneg %p179
        $region50: #{cr_layer.5} parent=47 // pred_check_branch
          %374 = sbr.rel (%p372) target = $region52
        $region51: #{cr_layer.5} parent=47 // pred_region
          %s375 = sand.u32 %s164, 1
          %s376 = scalar_lea.sflag [#allocation3], %s375
          %s377 = sand.u32 %s164, 1
          %s378 = smul.addr %s377, 16
          %s379 = scalar_lea.vmem [#allocation2], %s378
          %381 = dma.done %s376, 256
        $region52: #{cr_layer.5} parent=47 // pred_fallthru
          _
      $region48: #{cr_layer.5} parent=5 // pred_fallthru
        _
    $region6: #{cr_layer.5} parent=1 // loop_footer
      %s18 = sadd.s32 1, %s14
    $region7: #{cr_layer.5} parent=1 // loop_footer_branch
      %13 = sbr.rel target = $region3
    $region8: #{cr_layer.5} parent=1 // loop_exit
      _
    %382 = vsyncpa [#allocation3], 1
    %s383 = scalar_lea.sflag [#allocation3], 1
    %384 = vsyncpa %s383, 1

// kernel: cr_layer.4
$region0: #{cr_layer.4}
  #allocation0 [shape = 'u32[]', space=smem, size = 0x4, offset = 0x4, fixed_abs, tag = 'smem constant byte address 0x4 - core index']
  #allocation1 [shape = 'u32[72,128]{1,0:T(1,128)}', space=vmem, size = 0x9000, scoped, tag = 'internal scratch']
  %s0 = inlined_call_operand.vmem [shape: f32[2,16,8], index: 0, kind: input, shape index: {}]
  %s1 = inlined_call_operand.vmem [shape: f32[2,8,128], index: 1, kind: input, shape index: {}]
  %s2 = inlined_call_operand.vmem [shape: f32[2,16,128], index: 2, kind: input, shape index: {}]
  %s3 = inlined_call_operand.vmem [shape: f32[2,1,128], index: 3, kind: input, shape index: {}]
  %s4 = inlined_call_operand.vmem [shape: f32[2,1,128], index: 4, kind: input, shape index: {}]
  %s5 = inlined_call_operand.vmem [shape: f32[128,128], index: 5, kind: input, shape index: {}]
  %s6 = inlined_call_operand.vmem [shape: f32[1,128], index: 6, kind: input, shape index: {}]
  %s7 = inlined_call_operand.vmem [shape: f32[2,16,128], index: 7, kind: output, shape index: {0}]
  %s8 = inlined_call_operand.vmem [shape: f32[2,2,128], index: 8, kind: output, shape index: {1}]
  %9 = xla_tuple %s7, %s8
  %s10 = sld [smem:[#allocation0]]
  $region73: #{cr_layer.4} parent=0
    _
  %s12 = ssub.s32 1, %s10
  %s13 = scalar_select 0, %s12, %s10
  loop: start=0, step=1, limit=4
  $region2: #{cr_layer.4} parent=0 // loop_pre_header
    _
  $region3: #{cr_layer.4} parent=0 // loop_header
    %s15 = sphi 0, %s19
    %p16 = scmp.ge.s32.totalorder %s15, 4
    %s22 = sphi 0, %s34
    %s23 = sphi 0, %s30
    %s24 = sphi 0, %s22
    %s25 = sphi 0, %s23
    %s26 = sphi 0, %s24
    %s27 = sphi 0, %s25
    %s39 = sphi 0, %s41
    %s42 = sphi 0, %s39
    %s43 = sphi 0, %s42
    %s59 = sphi 0, %s43
    %s65 = sphi 0, %s67
    %s68 = sphi 0, %s65
    %s69 = sphi 0, %s68
    %s85 = sphi 0, %s69
    %s93 = sphi 0, %s95
    %s96 = sphi 0, %s93
    %s97 = sphi 0, %s96
    %s113 = sphi 0, %s97
    %s119 = sphi 0, %s121
    %s122 = sphi 0, %s119
    %s123 = sphi 0, %s122
    %s139 = sphi 0, %s123
    %s145 = sphi 0, %s147
    %s148 = sphi 0, %s145
    %s149 = sphi 0, %s148
    %s165 = sphi 0, %s149
    %s169 = sphi 0, %s169
    %s171 = sphi 0, %s169
    %s172 = sphi 0, %s171
    %s186 = sphi 0, %s172
    %s190 = sphi 0, %s190
    %s192 = sphi 0, %s190
    %s193 = sphi 0, %s192
    %s207 = sphi 0, %s193
    %s215 = sphi 0, %s217
    %s218 = sphi 0, %s215
    %s219 = sphi 0, %s218
    %s235 = sphi 0, %s219
    %s241 = sphi 0, %s243
    %s244 = sphi 0, %s241
    %s245 = sphi 0, %s244
    %s261 = sphi 0, %s245
  $region4: #{cr_layer.4} parent=0 // loop_header_branch
    %18 = sbr.rel (%p16) target = $region8
  $region5: #{cr_layer.4} parent=0 // loop_body
    %s20 = ssub.s32 %s15, 1
    %s21 = ssub.s32 %s15, 2
    %s28 = sadd.s32 1, %s23
    %p29 = scmp.ge.s32.totalorder %s28, 1
    %s30 = scalar_select %p29, 0, %s28
    %s31 = sadd.s32 1, %s22
    %s32 = scalar_select %p29, %s31, %s22
    %p33 = scmp.ge.s32.totalorder %s32, 2
    %s34 = scalar_select %p33, 0, %s32
    %s35 = ssub.s32 %s22, %s34
    %s36 = ssub.s32 %s23, %s30
    %s37 = sor.u32 %s35, %s36
    %p38 = scmp.eq.s32.totalorder %s37, 0
    %s40 = sadd.s32 %s39, 1
    %s41 = scalar_select %p38, %s39, %s40
    %p44 = pneg %p38
    %p45 = scmp.eq.s32.totalorder %s15, 1
    %p46 = por %p44, %p45
    %p47 = scmp.ne.s32.totalorder %s39, %s42
    %p48 = scmp.eq.s32.totalorder %s15, 0
    %p49 = por %p47, %p48
    %p50 = scmp.ne.s32.totalorder %s39, %s42
    %p51 = scmp.eq.s32.totalorder %s20, 1
    %p52 = por %p50, %p51
    %p53 = scmp.ne.s32.totalorder %s42, %s43
    %p54 = scmp.eq.s32.totalorder %s20, 0
    %p55 = por %p53, %p54
    %p56 = scmp.ne.s32.totalorder %s42, %s43
    %p57 = scmp.eq.s32.totalorder %s21, 1
    %p58 = por %p56, %p57
    %p60 = scmp.ne.s32.totalorder %s43, %s59
    %p61 = scmp.eq.s32.totalorder %s21, 0
    %p62 = por %p60, %p61
    %s63 = ssub.s32 %s22, %s34
    %p64 = scmp.eq.s32.totalorder %s63, 0
    %s66 = sadd.s32 %s65, 1
    %s67 = scalar_select %p64, %s65, %s66
    %p70 = pneg %p64
    %p71 = scmp.eq.s32.totalorder %s15, 1
    %p72 = por %p70, %p71
    %p73 = scmp.ne.s32.totalorder %s65, %s68
    %p74 = scmp.eq.s32.totalorder %s15, 0
    %p75 = por %p73, %p74
    %p76 = scmp.ne.s32.totalorder %s65, %s68
    %p77 = scmp.eq.s32.totalorder %s20, 1
    %p78 = por %p76, %p77
    %p79 = scmp.ne.s32.totalorder %s68, %s69
    %p80 = scmp.eq.s32.totalorder %s20, 0
    %p81 = por %p79, %p80
    %p82 = scmp.ne.s32.totalorder %s68, %s69
    %p83 = scmp.eq.s32.totalorder %s21, 1
    %p84 = por %p82, %p83
    %p86 = scmp.ne.s32.totalorder %s69, %s85
    %p87 = scmp.eq.s32.totalorder %s21, 0
    %p88 = por %p86, %p87
    %s89 = ssub.s32 %s22, %s34
    %s90 = ssub.s32 %s23, %s30
    %s91 = sor.u32 %s89, %s90
    %p92 = scmp.eq.s32.totalorder %s91, 0
    %s94 = sadd.s32 %s93, 1
    %s95 = scalar_select %p92, %s93, %s94
    %p98 = pneg %p92
    %p99 = scmp.eq.s32.totalorder %s15, 1
    %p100 = por %p98, %p99
    %p101 = scmp.ne.s32.totalorder %s93, %s96
    %p102 = scmp.eq.s32.totalorder %s15, 0
    %p103 = por %p101, %p102
    %p104 = scmp.ne.s32.totalorder %s93, %s96
    %p105 = scmp.eq.s32.totalorder %s20, 1
    %p106 = por %p104, %p105
    %p107 = scmp.ne.s32.totalorder %s96, %s97
    %p108 = scmp.eq.s32.totalorder %s20, 0
    %p109 = por %p107, %p108
    %p110 = scmp.ne.s32.totalorder %s96, %s97
    %p111 = scmp.eq.s32.totalorder %s21, 1
    %p112 = por %p110, %p111
    %p114 = scmp.ne.s32.totalorder %s97, %s113
    %p115 = scmp.eq.s32.totalorder %s21, 0
    %p116 = por %p114, %p115
    %s117 = ssub.s32 %s22, %s34
    %p118 = scmp.eq.s32.totalorder %s117, 0
    %s120 = sadd.s32 %s119, 1
    %s121 = scalar_select %p118, %s119, %s120
    %p124 = pneg %p118
    %p125 = scmp.eq.s32.totalorder %s15, 1
    %p126 = por %p124, %p125
    %p127 = scmp.ne.s32.totalorder %s119, %s122
    %p128 = scmp.eq.s32.totalorder %s15, 0
    %p129 = por %p127, %p128
    %p130 = scmp.ne.s32.totalorder %s119, %s122
    %p131 = scmp.eq.s32.totalorder %s20, 1
    %p132 = por %p130, %p131
    %p133 = scmp.ne.s32.totalorder %s122, %s123
    %p134 = scmp.eq.s32.totalorder %s20, 0
    %p135 = por %p133, %p134
    %p136 = scmp.ne.s32.totalorder %s122, %s123
    %p137 = scmp.eq.s32.totalorder %s21, 1
    %p138 = por %p136, %p137
    %p140 = scmp.ne.s32.totalorder %s123, %s139
    %p141 = scmp.eq.s32.totalorder %s21, 0
    %p142 = por %p140, %p141
    %s143 = ssub.s32 %s22, %s34
    %p144 = scmp.eq.s32.totalorder %s143, 0
    %s146 = sadd.s32 %s145, 1
    %s147 = scalar_select %p144, %s145, %s146
    %p150 = pneg %p144
    %p151 = scmp.eq.s32.totalorder %s15, 1
    %p152 = por %p150, %p151
    %p153 = scmp.ne.s32.totalorder %s145, %s148
    %p154 = scmp.eq.s32.totalorder %s15, 0
    %p155 = por %p153, %p154
    %p156 = scmp.ne.s32.totalorder %s145, %s148
    %p157 = scmp.eq.s32.totalorder %s20, 1
    %p158 = por %p156, %p157
    %p159 = scmp.ne.s32.totalorder %s148, %s149
    %p160 = scmp.eq.s32.totalorder %s20, 0
    %p161 = por %p159, %p160
    %p162 = scmp.ne.s32.totalorder %s148, %s149
    %p163 = scmp.eq.s32.totalorder %s21, 1
    %p164 = por %p162, %p163
    %p166 = scmp.ne.s32.totalorder %s149, %s165
    %p167 = scmp.eq.s32.totalorder %s21, 0
    %p168 = por %p166, %p167
    %s170 = sadd.s32 %s169, 1
    %p173 = scmp.eq.s32.totalorder %s15, 1
    %p174 = scmp.ne.s32.totalorder %s169, %s171
    %p175 = scmp.eq.s32.totalorder %s15, 0
    %p176 = por %p174, %p175
    %p177 = scmp.ne.s32.totalorder %s169, %s171
    %p178 = scmp.eq.s32.totalorder %s20, 1
    %p179 = por %p177, %p178
    %p180 = scmp.ne.s32.totalorder %s171, %s172
    %p181 = scmp.eq.s32.totalorder %s20, 0
    %p182 = por %p180, %p181
    %p183 = scmp.ne.s32.totalorder %s171, %s172
    %p184 = scmp.eq.s32.totalorder %s21, 1
    %p185 = por %p183, %p184
    %p187 = scmp.ne.s32.totalorder %s172, %s186
    %p188 = scmp.eq.s32.totalorder %s21, 0
    %p189 = por %p187, %p188
    %s191 = sadd.s32 %s190, 1
    %p194 = scmp.eq.s32.totalorder %s15, 1
    %p195 = scmp.ne.s32.totalorder %s190, %s192
    %p196 = scmp.eq.s32.totalorder %s15, 0
    %p197 = por %p195, %p196
    %p198 = scmp.ne.s32.totalorder %s190, %s192
    %p199 = scmp.eq.s32.totalorder %s20, 1
    %p200 = por %p198, %p199
    %p201 = scmp.ne.s32.totalorder %s192, %s193
    %p202 = scmp.eq.s32.totalorder %s20, 0
    %p203 = por %p201, %p202
    %p204 = scmp.ne.s32.totalorder %s192, %s193
    %p205 = scmp.eq.s32.totalorder %s21, 1
    %p206 = por %p204, %p205
    %p208 = scmp.ne.s32.totalorder %s193, %s207
    %p209 = scmp.eq.s32.totalorder %s21, 0
    %p210 = por %p208, %p209
    %s211 = ssub.s32 %s22, %s34
    %s212 = ssub.s32 %s23, %s30
    %s213 = sor.u32 %s211, %s212
    %p214 = scmp.eq.s32.totalorder %s213, 0
    %s216 = sadd.s32 %s215, 1
    %s217 = scalar_select %p214, %s215, %s216
    %p220 = pneg %p214
    %p221 = scmp.eq.s32.totalorder %s15, 1
    %p222 = por %p220, %p221
    %p223 = scmp.ne.s32.totalorder %s215, %s218
    %p224 = scmp.eq.s32.totalorder %s15, 0
    %p225 = por %p223, %p224
    %p226 = scmp.ne.s32.totalorder %s215, %s218
    %p227 = scmp.eq.s32.totalorder %s20, 1
    %p228 = por %p226, %p227
    %p229 = scmp.ne.s32.totalorder %s218, %s219
    %p230 = scmp.eq.s32.totalorder %s20, 0
    %p231 = por %p229, %p230
    %p232 = scmp.ne.s32.totalorder %s218, %s219
    %p233 = scmp.eq.s32.totalorder %s21, 1
    %p234 = por %p232, %p233
    %p236 = scmp.ne.s32.totalorder %s219, %s235
    %p237 = scmp.eq.s32.totalorder %s21, 0
    %p238 = por %p236, %p237
    %s239 = ssub.s32 %s22, %s34
    %p240 = scmp.eq.s32.totalorder %s239, 0
    %s242 = sadd.s32 %s241, 1
    %s243 = scalar_select %p240, %s241, %s242
    %p246 = pneg %p240
    %p247 = scmp.eq.s32.totalorder %s15, 1
    %p248 = por %p246, %p247
    %p249 = scmp.ne.s32.totalorder %s241, %s244
    %p250 = scmp.eq.s32.totalorder %s15, 0
    %p251 = por %p249, %p250
    %p252 = scmp.ne.s32.totalorder %s241, %s244
    %p253 = scmp.eq.s32.totalorder %s20, 1
    %p254 = por %p252, %p253
    %p255 = scmp.ne.s32.totalorder %s244, %s245
    %p256 = scmp.eq.s32.totalorder %s20, 0
    %p257 = por %p255, %p256
    %p258 = scmp.ne.s32.totalorder %s244, %s245
    %p259 = scmp.eq.s32.totalorder %s21, 1
    %p260 = por %p258, %p259
    %p262 = scmp.ne.s32.totalorder %s245, %s261
    %p263 = scmp.eq.s32.totalorder %s21, 0
    %p264 = por %p262, %p263
    %p265 = scmp.le.s32.totalorder 1, %s15
    %p266 = scmp.lt.s32.totalorder %s15, 3
    %p267 = pnand %p265, %p266
    %p268 = pneg %p267
    // Predicated region
    $region9: #{cr_layer.4} parent=5 // pred_check
      _
    $region10: #{cr_layer.4} parent=5 // pred_check_branch
      %270 = sbr.rel (%p267) target = $region12
    $region11: #{cr_layer.4} parent=5 // pred_region
      %s271 = ssub.s32 %s15, 1
      // Predicated region
      $region13: #{cr_layer.4} parent=11 // pred_check
        %p272 = pneg %p182
      $region14: #{cr_layer.4} parent=11 // pred_check_branch
        %274 = sbr.rel (%p272) target = $region16
      $region15: #{cr_layer.4} parent=11 // pred_region
        _
      $region16: #{cr_layer.4} parent=11 // pred_fallthru
        _
      // Predicated region
      $region17: #{cr_layer.4} parent=11 // pred_check
        %p275 = pneg %p203
      $region18: #{cr_layer.4} parent=11 // pred_check_branch
        %277 = sbr.rel (%p275) target = $region20
      $region19: #{cr_layer.4} parent=11 // pred_region
        _
      $region20: #{cr_layer.4} parent=11 // pred_fallthru
        _
    $region12: #{cr_layer.4} parent=5 // pred_fallthru
      _
    %p278 = scmp.lt.s32.totalorder %s15, 2
    // Predicated region
    $region21: #{cr_layer.4} parent=5 // pred_check
      %p279 = pneg %p278
    $region22: #{cr_layer.4} parent=5 // pred_check_branch
      %281 = sbr.rel (%p279) target = $region24
    $region23: #{cr_layer.4} parent=5 // pred_region
      // Predicated region
      $region25: #{cr_layer.4} parent=23 // pred_check
        %p282 = pneg %p49
      $region26: #{cr_layer.4} parent=23 // pred_check_branch
        %284 = sbr.rel (%p282) target = $region28
      $region27: #{cr_layer.4} parent=23 // pred_region
        %s285 = smul.u32 2, %s23
        %p286 = scmp.lt.s32.totalorder %s22, 1
        %s287 = scalar_select %p286, %s22, 1
        %p288 = scmp.lt.s32.totalorder %s285, 1
        %s289 = scalar_select %p288, %s285, 1
        %s290 = smul.addr %s287, 2
        %s291 = sadd.s32 %s289, %s290
        %s292 = smul.addr %s291, 8
        %s293 = scalar_lea.vmem %s0, %s292
        %s294 = smul.u32 2, %s23
      $region28: #{cr_layer.4} parent=23 // pred_fallthru
        _
      // Predicated region
      $region29: #{cr_layer.4} parent=23 // pred_check
        %p295 = pneg %p75
      $region30: #{cr_layer.4} parent=23 // pred_check_branch
        %297 = sbr.rel (%p295) target = $region32
      $region31: #{cr_layer.4} parent=23 // pred_region
        %p298 = scmp.lt.s32.totalorder %s22, 1
        %s299 = scalar_select %p298, %s22, 1
        %s300 = smul.addr %s299, 8
        %s301 = scalar_lea.vmem %s1, %s300
      $region32: #{cr_layer.4} parent=23 // pred_fallthru
        _
      // Predicated region
      $region33: #{cr_layer.4} parent=23 // pred_check
        %p302 = pneg %p103
      $region34: #{cr_layer.4} parent=23 // pred_check_branch
        %304 = sbr.rel (%p302) target = $region36
      $region35: #{cr_layer.4} parent=23 // pred_region
        %s305 = smul.u32 2, %s23
        %p306 = scmp.lt.s32.totalorder %s22, 1
        %s307 = scalar_select %p306, %s22, 1
        %p308 = scmp.lt.s32.totalorder %s305, 1
        %s309 = scalar_select %p308, %s305, 1
        %s310 = smul.addr %s307, 2
        %s311 = sadd.s32 %s309, %s310
        %s312 = smul.addr %s311, 8
        %s313 = scalar_lea.vmem %s2, %s312
        %s314 = smul.u32 2, %s23
      $region36: #{cr_layer.4} parent=23 // pred_fallthru
        _
      // Predicated region
      $region37: #{cr_layer.4} parent=23 // pred_check
        %p315 = pneg %p129
      $region38: #{cr_layer.4} parent=23 // pred_check_branch
        %317 = sbr.rel (%p315) target = $region40
      $region39: #{cr_layer.4} parent=23 // pred_region
        %p318 = scmp.lt.s32.totalorder %s22, 1
        %s319 = scalar_select %p318, %s22, 1
        %s320 = scalar_lea.vmem %s3, %s319
      $region40: #{cr_layer.4} parent=23 // pred_fallthru
        _
      // Predicated region
      $region41: #{cr_layer.4} parent=23 // pred_check
        %p321 = pneg %p155
      $region42: #{cr_layer.4} parent=23 // pred_check_branch
        %323 = sbr.rel (%p321) target = $region44
      $region43: #{cr_layer.4} parent=23 // pred_region
        %p324 = scmp.lt.s32.totalorder %s22, 1
        %s325 = scalar_select %p324, %s22, 1
        %s326 = scalar_lea.vmem %s4, %s325
      $region44: #{cr_layer.4} parent=23 // pred_fallthru
        _
    $region24: #{cr_layer.4} parent=5 // pred_fallthru
      _
    %p327 = scmp.le.s32.totalorder 1, %s15
    %p328 = scmp.lt.s32.totalorder %s15, 3
    %p329 = pnand %p327, %p328
    %p330 = pneg %p329
    // Predicated region
    $region45: #{cr_layer.4} parent=5 // pred_check
      _
    $region46: #{cr_layer.4} parent=5 // pred_check_branch
      %332 = sbr.rel (%p329) target = $region48
    $region47: #{cr_layer.4} parent=5 // pred_region
      %s333 = ssub.s32 %s15, 1
      %s334 = smul.u32 2, %s25
      %p335 = scmp.lt.s32.totalorder %s24, 1
      %s336 = scalar_select %p335, %s24, 1
      %p337 = scmp.lt.s32.totalorder %s334, 1
      %s338 = scalar_select %p337, %s334, 1
      %s339 = smul.addr %s336, 2
      %s340 = sadd.s32 %s338, %s339
      %s341 = smul.addr %s340, 8
      %s342 = scalar_lea.vmem %s0, %s341
      %p343 = pneg %p55
      %p344 = pneg %p52
      %p345 = scmp.lt.s32.totalorder %s24, 1
      %s346 = scalar_select %p345, %s24, 1
      %s347 = smul.addr %s346, 8
      %s348 = scalar_lea.vmem %s1, %s347
      %p349 = pneg %p81
      %p350 = pneg %p78
      %s351 = smul.u32 2, %s25
      %p352 = scmp.lt.s32.totalorder %s24, 1
      %s353 = scalar_select %p352, %s24, 1
      %p354 = scmp.lt.s32.totalorder %s351, 1
      %s355 = scalar_select %p354, %s351, 1
      %s356 = smul.addr %s353, 2
      %s357 = sadd.s32 %s355, %s356
      %s358 = smul.addr %s357, 8
      %s359 = scalar_lea.vmem %s2, %s358
      %p360 = pneg %p109
      %p361 = pneg %p106
      %p362 = scmp.lt.s32.totalorder %s24, 1
      %s363 = scalar_select %p362, %s24, 1
      %s364 = scalar_lea.vmem %s3, %s363
      %p365 = pneg %p135
      %p366 = pneg %p132
      %p367 = scmp.lt.s32.totalorder %s24, 1
      %s368 = scalar_select %p367, %s24, 1
      %s369 = scalar_lea.vmem %s4, %s368
      %p370 = pneg %p161
      %p371 = pneg %p158
      %p372 = pneg %p182
      %p373 = pneg %p179
      %p374 = pneg %p203
      %p375 = pneg %p200
      %p376 = pneg %p231
      %p377 = pneg %p228
      %s378 = smul.u32 2, %s25
      %p379 = scmp.lt.s32.totalorder %s24, 1
      %s380 = scalar_select %p379, %s24, 1
      %p381 = scmp.lt.s32.totalorder %s378, 1
      %s382 = scalar_select %p381, %s378, 1
      %s383 = smul.addr %s380, 2
      %s384 = sadd.s32 %s382, %s383
      %s385 = smul.addr %s384, 8
      %s386 = scalar_lea.vmem %s7, %s385
      %p387 = pneg %p257
      %p388 = pneg %p254
      %p389 = scmp.lt.s32.totalorder %s24, 1
      %s390 = scalar_select %p389, %s24, 1
      %s391 = smul.addr %s390, 2
      %s392 = scalar_lea.vmem %s8, %s391
      %s393 = smul.u32 2, %s25
      %p394 = scmp.lt.s32.totalorder %s24, 1
      %s395 = scalar_select %p394, %s24, 1
      %p396 = scmp.lt.s32.totalorder %s393, 1
      %s397 = scalar_select %p396, %s393, 1
      %s398 = smul.addr %s395, 2
      %s399 = sadd.s32 %s397, %s398
      %s400 = smul.addr %s399, 8
      %s401 = scalar_lea.vmem %s0, %s400
      %s402 = smul.u32 2, %s25
      %p403 = scmp.lt.s32.totalorder %s24, 1
      %s404 = scalar_select %p403, %s24, 1
      %s405 = smul.addr %s404, 8
      %s406 = scalar_lea.vmem %s1, %s405
      %s407 = smul.u32 2, %s25
      %p408 = scmp.lt.s32.totalorder %s24, 1
      %s409 = scalar_select %p408, %s24, 1
      %p410 = scmp.lt.s32.totalorder %s407, 1
      %s411 = scalar_select %p410, %s407, 1
      %s412 = smul.addr %s409, 2
      %s413 = sadd.s32 %s411, %s412
      %s414 = smul.addr %s413, 8
      %s415 = scalar_lea.vmem %s2, %s414
      %s416 = smul.u32 2, %s25
      %p417 = scmp.lt.s32.totalorder %s24, 1
      %s418 = scalar_select %p417, %s24, 1
      %s419 = scalar_lea.vmem %s3, %s418
      %p420 = scmp.lt.s32.totalorder %s24, 1
      %s421 = scalar_select %p420, %s24, 1
      %s422 = scalar_lea.vmem %s4, %s421
      %s423 = smul.u32 2, %s25
      %p424 = scmp.lt.s32.totalorder %s24, 1
      %s425 = scalar_select %p424, %s24, 1
      %p426 = scmp.lt.s32.totalorder %s423, 1
      %s427 = scalar_select %p426, %s423, 1
      %s428 = smul.addr %s425, 2
      %s429 = sadd.s32 %s427, %s428
      %s430 = smul.addr %s429, 8
      %s431 = scalar_lea.vmem %s7, %s430
      %s432 = smul.u32 2, %s25
      %p433 = scmp.lt.s32.totalorder %s24, 1
      %s434 = scalar_select %p433, %s24, 1
      %s435 = smul.addr %s434, 2
      %s436 = scalar_lea.vmem %s8, %s435
      %p437 = scmp.eq.s32.totalorder %s25, 0
      // Predicated region
      $region49: #{cr_layer.4} parent=47 // pred_check
        %p438 = pneg %p437
      $region50: #{cr_layer.4} parent=47 // pred_check_branch
        %440 = sbr.rel (%p438) target = $region52
      $region51: #{cr_layer.4} parent=47 // pred_region
        %441 = vst [vmem:[%s436] sm:$0x3] 0.0
      $region52: #{cr_layer.4} parent=47 // pred_fallthru
        _
      %v442 = vld [vmem:[%s401] sm:$0xff]
      %v443 = vld [vmem:[%s401 + $0x8] sm:$0xff]
      %v444 = vld [vmem:[%s406] sm:$0xff]
      %vm445 = vcmask 64512
      %v447 = vsel %vm445, %v442, 0
      %v450 = vsel %vm445, %v443, 0
      %452 = vmatpush.msra.mxu0 0.0
      %453 = vmatpush.msra.mxu0 0.0
      %454 = vmatpush.msra.mxu0 0.0
      %455 = vmatpush.msra.mxu0 0.0
      %456 = vmatpush.msra.mxu0 0.0
      %457 = vmatpush.msra.mxu0 0.0
      %458 = vmatpush.msra.mxu0 0.0
      %459 = vmatpush.msra.mxu0 0.0
      %460 = vmatpush.msra.mxu0 0.0
      %461 = vmatpush.msra.mxu0 0.0
      %462 = vmatpush.msra.mxu0 0.0
      %463 = vmatpush.msra.mxu0 0.0
      %464 = vmatpush.msra.mxu0 0.0
      %465 = vmatpush.msra.mxu0 0.0
      %466 = vmatpush.msra.mxu0 0.0
      %467 = vmatpush.msra.mxu0 %v444
      %468 = vmatmul.f32.gmra.mxu0 %v447
      %v469 = vpop.f32.mrf.mxu0
      %v470 = vadd.f32 0.0, %v469
      %471 = vmatmul.f32.gmra.mxu0 %v450
      %v472 = vpop.f32.mrf.mxu0
      %v473 = vadd.f32 0.0, %v472
      %474 = vdwg.mxu0
      %v475 = vld [vmem:[%s415] sm:$0xff]
      %v476 = vld [vmem:[%s415 + $0x8] sm:$0xff]
      %v477 = vsub.f32 %v470, %v475
      %v478 = vsub.f32 %v473, %v476
      %v479 = vld [vmem:[%s419] sm:$0x1]
      %v481 = vperm.slane %v479, 0
      %v483 = vmul.f32 %v477, %v481
      %v484 = vmul.f32 %v478, %v481
      %v485 = vld [vmem:[%s422] sm:$0x1]
      %v487 = vperm.slane %v485, 0
      %v489 = vadd.f32 %v483, %v487
      %v490 = vadd.f32 %v484, %v487
      %v491 = vmax.f32 %v489, 0.0
      %v492 = vmax.f32 %v490, 0.0
      %v493 = vld [vmem:[%s5] sm:$0xff]
      %v494 = vld [vmem:[%s5 + $0x8] sm:$0xff]
      %v495 = vld [vmem:[%s5 + $0x10] sm:$0xff]
      %v496 = vld [vmem:[%s5 + $0x18] sm:$0xff]
      %v497 = vld [vmem:[%s5 + $0x20] sm:$0xff]
      %v498 = vld [vmem:[%s5 + $0x28] sm:$0xff]
      %v499 = vld [vmem:[%s5 + $0x30] sm:$0xff]
      %v500 = vld [vmem:[%s5 + $0x38] sm:$0xff]
      %v501 = vld [vmem:[%s5 + $0x40] sm:$0xff]
      %v502 = vld [vmem:[%s5 + $0x48] sm:$0xff]
      %v503 = vld [vmem:[%s5 + $0x50] sm:$0xff]
      %v504 = vld [vmem:[%s5 + $0x58] sm:$0xff]
      %v505 = vld [vmem:[%s5 + $0x60] sm:$0xff]
      %v506 = vld [vmem:[%s5 + $0x68] sm:$0xff]
      %v507 = vld [vmem:[%s5 + $0x70] sm:$0xff]
      %v508 = vld [vmem:[%s5 + $0x78] sm:$0xff]
      %v509 = vld [vmem:[%s6] sm:$0x1]
      %v511 = vperm.slane %v509, 0
      %513 = vmatpush.msra.mxu0 %v508
      %514 = vmatpush.msra.mxu0 %v507
      %515 = vmatpush.msra.mxu0 %v506
      %516 = vmatpush.msra.mxu0 %v505
      %517 = vmatpush.msra.mxu0 %v504
      %518 = vmatpush.msra.mxu0 %v503
      %519 = vmatpush.msra.mxu0 %v502
      %520 = vmatpush.msra.mxu0 %v501
      %521 = vmatpush.msra.mxu0 %v500
      %522 = vmatpush.msra.mxu0 %v499
      %523 = vmatpush.msra.mxu0 %v498
      %524 = vmatpush.msra.mxu0 %v497
      %525 = vmatpush.msra.mxu0 %v496
      %526 = vmatpush.msra.mxu0 %v495
      %527 = vmatpush.msra.mxu0 %v494
      %528 = vmatpush.msra.mxu0 %v493
      %529 = vmatmul.f32.gmra.mxu0 %v491
      %v530 = vpop.f32.mrf.mxu0
      %v531 = vadd.f32 %v511, %v530
      %532 = vmatmul.f32.gmra.mxu0 %v492
      %v533 = vpop.f32.mrf.mxu0
      %v534 = vadd.f32 %v511, %v533
      %535 = vdwg.mxu0
      %536 = vst [vmem:[%s431] sm:$0xff] %v531
      %537 = vst [vmem:[%s431 + $0x8] sm:$0xff] %v534
      %v538 = vld [vmem:[%s436] sm:$0x1]
      %v539 = vadd.f32 %v531, %v534
      %v540 = vrot.slane %v539, 4
      %v541 = vadd.f32 %v539, %v540
      %v542 = vrot.slane %v541, 2
      %v543 = vadd.f32 %v541, %v542
      %v544 = vrot.slane %v543, 1
      %v545 = vadd.f32 %v543, %v544
      %v546 = vadd.f32 %v538, %v545
      %547 = vst [vmem:[%s436] sm:$0x1] %v546
      %v548 = vld [vmem:[%s436 + $0x1] sm:$0x1]
      %v549 = vmul.f32 %v531, %v531
      %v550 = vmul.f32 %v534, %v534
      %v551 = vadd.f32 %v549, %v550
      %v552 = vrot.slane %v551, 4
      %v553 = vadd.f32 %v551, %v552
      %v554 = vrot.slane %v553, 2
      %v555 = vadd.f32 %v553, %v554
      %v556 = vrot.slane %v555, 1
      %v557 = vadd.f32 %v555, %v556
      %v558 = vadd.f32 %v548, %v557
      %559 = vst [vmem:[%s436 + $0x1] sm:$0x1] %v558
      %s560 = smul.u32 2, %s25
      %p561 = scmp.lt.s32.totalorder %s24, 1
      %s562 = scalar_select %p561, %s24, 1
      %p563 = scmp.lt.s32.totalorder %s560, 1
      %s564 = scalar_select %p563, %s560, 1
      %s565 = smul.addr %s562, 2
      %s566 = sadd.s32 %s564, %s565
      %s567 = smul.addr %s566, 8
      %s568 = scalar_lea.vmem %s7, %s567
      %p569 = scmp.lt.s32.totalorder %s24, 1
      %s570 = scalar_select %p569, %s24, 1
      %s571 = smul.addr %s570, 2
      %s572 = scalar_lea.vmem %s8, %s571
      // Predicated region
      $region53: #{cr_layer.4} parent=47 // pred_check
        %p573 = pneg %p228
      $region54: #{cr_layer.4} parent=47 // pred_check_branch
        %575 = sbr.rel (%p573) target = $region56
      $region55: #{cr_layer.4} parent=47 // pred_region
        %s576 = smul.u32 2, %s25
      $region56: #{cr_layer.4} parent=47 // pred_fallthru
        _
      // Predicated region
      $region57: #{cr_layer.4} parent=47 // pred_check
        %p577 = pneg %p254
      $region58: #{cr_layer.4} parent=47 // pred_check_branch
        %579 = sbr.rel (%p577) target = $region60
      $region59: #{cr_layer.4} parent=47 // pred_region
        _
      $region60: #{cr_layer.4} parent=47 // pred_fallthru
        _
    $region48: #{cr_layer.4} parent=5 // pred_fallthru
      _
    %p580 = scmp.le.s32.totalorder 2, %s15
    // Predicated region
    $region61: #{cr_layer.4} parent=5 // pred_check
      %p581 = pneg %p580
    $region62: #{cr_layer.4} parent=5 // pred_check_branch
      %583 = sbr.rel (%p581) target = $region64
    $region63: #{cr_layer.4} parent=5 // pred_region
      %s584 = ssub.s32 %s15, 2
      // Predicated region
      $region65: #{cr_layer.4} parent=63 // pred_check
        %p585 = pneg %p234
      $region66: #{cr_layer.4} parent=63 // pred_check_branch
        %587 = sbr.rel (%p585) target = $region68
      $region67: #{cr_layer.4} parent=63 // pred_region
        %s588 = smul.u32 2, %s27
        %p589 = scmp.lt.s32.totalorder %s26, 1
        %s590 = scalar_select %p589, %s26, 1
        %p591 = scmp.lt.s32.totalorder %s588, 1
        %s592 = scalar_select %p591, %s588, 1
        %s593 = smul.addr %s590, 2
        %s594 = sadd.s32 %s592, %s593
        %s595 = smul.addr %s594, 8
        %s596 = scalar_lea.vmem %s7, %s595
      $region68: #{cr_layer.4} parent=63 // pred_fallthru
        _
      // Predicated region
      $region69: #{cr_layer.4} parent=63 // pred_check
        %p597 = pneg %p260
      $region70: #{cr_layer.4} parent=63 // pred_check_branch
        %599 = sbr.rel (%p597) target = $region72
      $region71: #{cr_layer.4} parent=63 // pred_region
        %p600 = scmp.lt.s32.totalorder %s26, 1
        %s601 = scalar_select %p600, %s26, 1
        %s602 = smul.addr %s601, 2
        %s603 = scalar_lea.vmem %s8, %s602
      $region72: #{cr_layer.4} parent=63 // pred_fallthru
        _
    $region64: #{cr_layer.4} parent=5 // pred_fallthru
      _
  $region6: #{cr_layer.4} parent=0 // loop_footer
    %s19 = sadd.s32 1, %s15
  $region7: #{cr_layer.4} parent=0 // loop_footer_branch
    %14 = sbr.rel target = $region3
  $region8: #{cr_layer.4} parent=0 // loop_exit
    _

</llo_original>
